<compile_context>
chip_gen: v7x
topology: tpu7x:2x2x1
jax: 0.10.0
libtpu: 0.0.40
codegen_flags: <defaults>
</compile_context>

<pallas_src>
import functools

import jax
import jax.numpy as jnp
from jax import lax
from jax.experimental import pallas as pl
from jax.experimental.pallas import tpu as pltpu

EPS = 1e-5
LANE = 128
_VMEM_LIMIT = 32 * 1024 * 1024  # explicit scoped-VMEM limit (safe on v5e/v6e/v7x)


def _round_up(x, m):
    return (x + m - 1) // m * m


def _choose_tile_h(H, W, cin_p, cout_p, itemsize, vmem_budget=8 * 1024 * 1024):
    """Largest row-band height dividing H whose pipelined working set fits the budget."""
    divisors = [t for t in range(2, H + 1) if H % t == 0]
    if not divisors:
        return max(H, 1)

    def need(t):
        in_bands = 2 * (2 * t * (W + 2) * cin_p * itemsize)   # two halo bands, double-buffered
        out_band = 2 * (t * W * cout_p * itemsize)            # y block, double-buffered
        weights = 2 * (9 * cin_p * cout_p * itemsize)
        acc = t * W * cout_p * 4                              # f32 accumulator
        return in_bands + out_band + weights + acc

    fits = [t for t in divisors if need(t) <= vmem_budget]
    return max(fits) if fits else divisors[0]


def _choose_tile_p(P):
    for t in (2048, 1024, 512, 256, 128, 64, 32, 16, 8):
        if P % t == 0:
            return t
    return P


# ------------------------------ Pallas kernels --------------------------------
def _conv_stats_kernel(x0_ref, x1_ref, w_ref, y_ref, st_ref, *,
                       tile_h, width, cin_p, cout_p):
    """Pass 1: 3x3 conv of one (image, row-band) tile + per-band BN partial stats.

    x0_ref/x1_ref: (1, tile_h, width+2, cin_p) two consecutive padded row bands of the
                   SAME input array (x1 supplies the +2 halo rows).
    w_ref:         (9, cin_p, cout_p)  per-tap weight matrices (tap = kh*3 + kw).
    y_ref:         (tile_h*width, cout_p) raw conv output (pre-BN), compute dtype.
    st_ref:        (1, 2, cout_p)      [sum, sum_of_squares] over this band, f32.
    """
    # Local window: band b plus band b+1 -> (2*tile_h, width+2, cin_p).
    xb = jnp.concatenate([x0_ref[0], x1_ref[0]], axis=0)
    acc = jnp.zeros((tile_h * width, cout_p), jnp.float32)
    for kh in range(3):                              # statically unrolled: 9 MXU matmuls
        rows = xb[kh:kh + tile_h]                    # (tile_h, width+2, cin_p)
        for kw in range(3):
            patch = rows[:, kw:kw + width, :].reshape(tile_h * width, cin_p)
            acc = acc + jnp.dot(patch, w_ref[kh * 3 + kw],
                                preferred_element_type=jnp.float32)
    y_ref[...] = acc.astype(y_ref.dtype)
    s1 = jnp.sum(acc, axis=0, keepdims=True)         # (1, cout_p) f32
    s2 = jnp.sum(acc * acc, axis=0, keepdims=True)   # (1, cout_p) f32
    st_ref[...] = jnp.concatenate([s1, s2], axis=0).reshape(1, 2, cout_p)


def _bn_relu_kernel(y_ref, scale_ref, shift_ref, out_ref):
    """Pass 2: folded BN affine + ReLU -> one FMA + max per element (f32 math)."""
    y = y_ref[...].astype(jnp.float32)
    out_ref[...] = jnp.maximum(y * scale_ref[...] + shift_ref[...], 0.0).astype(out_ref.dtype)


# ------------------------------ stage wrapper ----------------------------------
def _conv_bn_relu_stage(xp, w_oihw, gamma, beta, *, H, W, tile_h, compute_dtype):
    """One Conv3x3(pad=1, bias folded away) -> BatchNorm(batch stats) -> ReLU block.

    xp: (N, Hp, W+2, cin_p) zero-padded input (spatial pad 1 + band/channel padding),
        already in compute_dtype.
    Returns activated output, channel padded, flattened to (N*H*W, cout_p).
    """
    N, Hp, Wp2, cin_p = xp.shape
    assert Wp2 == W + 2
    n_bands = H // tile_h
    assert Hp == (n_bands + 1) * tile_h
    cout = w_oihw.shape[0]
    cout_p = _round_up(cout, LANE)
    rows_per_band = tile_h * W
    assert rows_per_band % 8 == 0, "tile_h * W must be a multiple of 8"

    # (O, I, 3, 3) -> (9, cin_p, cout_p), zero padding on both channel axes.
    w_t = jnp.transpose(w_oihw, (2, 3, 1, 0)).reshape(9, w_oihw.shape[1], cout)
    w_t = jnp.pad(w_t, ((0, 0), (0, cin_p - w_oihw.shape[1]), (0, cout_p - cout)))
    w_t = w_t.astype(compute_dtype)

    conv_kernel = functools.partial(_conv_stats_kernel, tile_h=tile_h, width=W,
                                    cin_p=cin_p, cout_p=cout_p)
    y_raw, pstats = pl.pallas_call(
        conv_kernel,
        grid=(N, n_bands),
        in_specs=[
            pl.BlockSpec((1, tile_h, W + 2, cin_p), lambda n, b: (n, b, 0, 0)),
            pl.BlockSpec((1, tile_h, W + 2, cin_p), lambda n, b: (n, b + 1, 0, 0)),
            pl.BlockSpec((9, cin_p, cout_p), lambda n, b: (0, 0, 0)),
        ],
        out_specs=[
            pl.BlockSpec((rows_per_band, cout_p), lambda n, b: (n * n_bands + b, 0)),
            pl.BlockSpec((1, 2, cout_p), lambda n, b: (n * n_bands + b, 0, 0)),
        ],
        out_shape=[
            jax.ShapeDtypeStruct((N * H * W, cout_p), compute_dtype),
            jax.ShapeDtypeStruct((N * n_bands, 2, cout_p), jnp.float32),
        ],
        compiler_params=pltpu.CompilerParams(
            dimension_semantics=("parallel", "parallel"),
            vmem_limit_bytes=_VMEM_LIMIT),
    )(xp, xp, w_t)

    # Tiny per-channel reduction + BN affine fold (f32, outside the hot loops).
    count = N * H * W
    s = jnp.sum(pstats, axis=0)                               # (2, cout_p)
    mean = s[0] / count
    var = jnp.maximum(s[1] / count - mean * mean, 0.0)        # biased variance (training BN)
    inv_std = lax.rsqrt(var + EPS)
    gamma_p = jnp.pad(gamma.astype(jnp.float32), (0, cout_p - cout))
    beta_p = jnp.pad(beta.astype(jnp.float32), (0, cout_p - cout))
    scale = (gamma_p * inv_std).reshape(1, cout_p)
    shift = (beta_p - mean * gamma_p * inv_std).reshape(1, cout_p)

    # Pass 2: lane-dense tiled normalize + ReLU.
    P = N * H * W
    tile_p = _choose_tile_p(P)
    y_act = pl.pallas_call(
        _bn_relu_kernel,
        grid=(P // tile_p,),
        in_specs=[
            pl.BlockSpec((tile_p, cout_p), lambda i: (i, 0)),
            pl.BlockSpec((1, cout_p), lambda i: (0, 0)),
            pl.BlockSpec((1, cout_p), lambda i: (0, 0)),
        ],
        out_specs=pl.BlockSpec((tile_p, cout_p), lambda i: (i, 0)),
        out_shape=jax.ShapeDtypeStruct((P, cout_p), compute_dtype),
        compiler_params=pltpu.CompilerParams(
            dimension_semantics=("parallel",),
            vmem_limit_bytes=_VMEM_LIMIT),
    )(y_raw, scale, shift)
    return y_act


def double_conv(x_nchw, params, *, compute_dtype=jnp.bfloat16, tile_h=None):
    """Forward of DoubleConv. x_nchw: (N, Cin, H, W) f32 -> (N, Cout, H, W) f32."""
    w1, b1, g1, be1, w2, b2, g2, be2 = params
    # Conv bias is a per-channel constant cancelled exactly by BatchNorm's mean
    # subtraction (training-mode batch stats), so it is folded away.
    del b1, b2
    N, Cin, H, W = x_nchw.shape
    Cmid, Cout = w1.shape[0], w2.shape[0]

    cin_p = _round_up(Cin, LANE)
    cmid_p = _round_up(Cmid, LANE)
    cout_p = _round_up(Cout, LANE)
    itemsize = jnp.dtype(compute_dtype).itemsize
    if tile_h is None:
        tile_h = _choose_tile_h(H, W, max(cin_p, cmid_p), max(cmid_p, cout_p), itemsize)
    assert H % tile_h == 0 and tile_h >= 2, (H, tile_h)
    n_bands = H // tile_h
    Hp = (n_bands + 1) * tile_h   # 1 top pad row + H rows + (tile_h - 1) bottom pad rows

    # NCHW -> NHWC, zero-pad: spatial halo + channel padding to a lane multiple.
    x = jnp.transpose(x_nchw, (0, 2, 3, 1)).astype(compute_dtype)
    xp = jnp.pad(x, ((0, 0), (1, Hp - H - 1), (1, 1), (0, cin_p - Cin)))

    y1 = _conv_bn_relu_stage(xp, w1, g1, be1, H=H, W=W, tile_h=tile_h,
                             compute_dtype=compute_dtype)
    # TODO(synk): fuse this re-pad + the stage-2 conv prologue so y1 bands stay resident
    # in VMEM instead of round-tripping through HBM (blocked by BN1's global statistics).
    y1p = jnp.pad(y1.reshape(N, H, W, cmid_p), ((0, 0), (1, Hp - H - 1), (1, 1), (0, 0)))

    y2 = _conv_bn_relu_stage(y1p, w2, g2, be2, H=H, W=W, tile_h=tile_h,
                             compute_dtype=compute_dtype)
    y2 = y2.reshape(N, H, W, cout_p)[..., :Cout]
    return jnp.transpose(y2, (0, 3, 1, 2)).astype(jnp.float32)


# ----------------------------- pure-JAX reference -----------------------------
def _ref_block(x, w, b, g, be):
    y = lax.conv_general_dilated(
        x, w, window_strides=(1, 1), padding=((1, 1), (1, 1)),
        dimension_numbers=("NCHW", "OIHW", "NCHW"))
    y = y + b[None, :, None, None]
    mean = jnp.mean(y, axis=(0, 2, 3), keepdims=True)
    var = jnp.mean(jnp.square(y), axis=(0, 2, 3), keepdims=True) - jnp.square(mean)
    yh = (y - mean) / jnp.sqrt(var + EPS)
    return jnp.maximum(g[None, :, None, None] * yh + be[None, :, None, None], 0.0)


def ref_double_conv(x, params):
    w1, b1, g1, be1, w2, b2, g2, be2 = params
    return _ref_block(_ref_block(x, w1, b1, g1, be1), w2, b2, g2, be2)


if __name__ == "__main__":
    # DoubleConv(in_channels=4, out_channels=8): mid_channels defaults to out_channels.
    N, Cin, H, W = 2, 4, 16, 16
    Cmid = 8
    Cout = 8

    key = jax.random.PRNGKey(0)
    ks = jax.random.split(key, 9)
    x = jax.random.normal(ks[0], (N, Cin, H, W), dtype=jnp.float32)

    w1 = jax.random.normal(ks[1], (Cmid, Cin, 3, 3), dtype=jnp.float32) * 0.2
    b1 = jax.random.normal(ks[2], (Cmid,), dtype=jnp.float32) * 0.1
    g1 = 1.0 + 0.1 * jax.random.normal(ks[3], (Cmid,), dtype=jnp.float32)
    be1 = 0.1 * jax.random.normal(ks[4], (Cmid,), dtype=jnp.float32)
    w2 = jax.random.normal(ks[5], (Cout, Cmid, 3, 3), dtype=jnp.float32) * 0.2
    b2 = jax.random.normal(ks[6], (Cout,), dtype=jnp.float32) * 0.1
    g2 = 1.0 + 0.1 * jax.random.normal(ks[7], (Cout,), dtype=jnp.float32)
    be2 = 0.1 * jax.random.normal(ks[8], (Cout,), dtype=jnp.float32)
    params = (w1, b1, g1, be1, w2, b2, g2, be2)

    ref = jax.block_until_ready(ref_double_conv(x, params))

    # tile_h=8 forces a multi-band grid even at this toy size (exercises the halo
    # BlockSpecs and the cross-tile BatchNorm statistics reduction).
    run_f32 = jax.jit(functools.partial(double_conv, compute_dtype=jnp.float32, tile_h=8))
    out_f32 = jax.block_until_ready(run_f32(x, params))
    assert out_f32.shape == (N, Cout, H, W), out_f32.shape
    err32 = float(jnp.max(jnp.abs(out_f32 - ref)))
    assert jnp.allclose(out_f32, ref, atol=1e-4, rtol=1e-4), err32

    # Performance path: bf16 MXU operands with f32 accumulation / f32 BN math.
    # Looser tolerance is purely bf16 operand rounding.
    run_bf16 = jax.jit(functools.partial(double_conv, compute_dtype=jnp.bfloat16, tile_h=8))
    out_bf16 = jax.block_until_ready(run_bf16(x, params))
    errbf = float(jnp.max(jnp.abs(out_bf16 - ref)))
    assert jnp.allclose(out_bf16, ref, atol=1e-1, rtol=1e-1), errbf

    print("KERNEL_OK")
</pallas_src>

<mosaic_0001>
module attributes {stable_mosaic.version = 11 : i64} {
  func.func @_conv_stats_kernel(%arg0: i32, %arg1: i32, %arg2: memref<1x8x18x128xf32, #tpu.memory_space<vmem>>, %arg3: memref<1x8x18x128xf32, #tpu.memory_space<vmem>>, %arg4: memref<9x128x128xf32, #tpu.memory_space<vmem>>, %arg5: memref<128x128xf32, #tpu.memory_space<vmem>>, %arg6: memref<1x2x128xf32, #tpu.memory_space<vmem>>) attributes {dimension_semantics = [#tpu.dimension_semantics<parallel>, #tpu.dimension_semantics<parallel>], iteration_bounds = array<i64: 2, 2>, scalar_prefetch = 0 : i64, scratch_operands = 0 : i64, tpu.core_type = #tpu.core_type<tc>, window_params = [{transform_indices = @transform_0, window_bounds = array<i64: 1, 8, 18, 128>}, {transform_indices = @transform_1, window_bounds = array<i64: 1, 8, 18, 128>}, {pipeline_mode = #tpu.pipeline_mode<synchronous>, transform_indices = @transform_2, window_bounds = array<i64: 9, 128, 128>}, {transform_indices = @transform_3, window_bounds = array<i64: 128, 128>}, {transform_indices = @transform_4, window_bounds = array<i64: 1, 2, 128>}]} {
    %c0 = arith.constant 0 : index
    %c0_0 = arith.constant 0 : index
    %c0_1 = arith.constant 0 : index
    %c0_2 = arith.constant 0 : index
    %0 = vector.load %arg2[%c0, %c0_0, %c0_1, %c0_2] : memref<1x8x18x128xf32, #tpu.memory_space<vmem>>, vector<1x8x18x128xf32>
    %1 = vector.shape_cast %0 : vector<1x8x18x128xf32> to vector<8x18x128xf32>
    %c0_3 = arith.constant 0 : index
    %c0_4 = arith.constant 0 : index
    %c0_5 = arith.constant 0 : index
    %c0_6 = arith.constant 0 : index
    %2 = vector.load %arg3[%c0_3, %c0_4, %c0_5, %c0_6] : memref<1x8x18x128xf32, #tpu.memory_space<vmem>>, vector<1x8x18x128xf32>
    %3 = vector.shape_cast %2 : vector<1x8x18x128xf32> to vector<8x18x128xf32>
    %4 = tpu.concatenate %1, %3 in 0 : vector<8x18x128xf32>, vector<8x18x128xf32> -> vector<16x18x128xf32>
    %cst = arith.constant 0.000000e+00 : f32
    %5 = vector.broadcast %cst : f32 to vector<128x128xf32>
    %6 = vector.extract_strided_slice %4 {offsets = [0, 0, 0], sizes = [8, 18, 128], strides = [1, 1, 1]} : vector<16x18x128xf32> to vector<8x18x128xf32>
    %7 = vector.extract_strided_slice %6 {offsets = [0, 0, 0], sizes = [8, 16, 128], strides = [1, 1, 1]} : vector<8x18x128xf32> to vector<8x16x128xf32>
    %8 = vector.shape_cast %7 : vector<8x16x128xf32> to vector<128x128xf32>
    %c0_7 = arith.constant 0 : index
    %c0_8 = arith.constant 0 : index
    %c0_9 = arith.constant 0 : index
    %9 = vector.load %arg4[%c0_7, %c0_8, %c0_9] : memref<9x128x128xf32, #tpu.memory_space<vmem>>, vector<1x128x128xf32>
    %10 = vector.shape_cast %9 : vector<1x128x128xf32> to vector<128x128xf32>
    %cst_10 = arith.constant dense<0.000000e+00> : vector<128x128xf32>
    %11 = tpu.matmul %8, %10, %cst_10 {dimension_numbers = #tpu.dot_dimension_numbers<[1], [0], [0], [1], [0, 0, 1, 1], [], []>} : vector<128x128xf32>, vector<128x128xf32>, vector<128x128xf32> -> vector<128x128xf32>
    %12 = arith.addf %5, %11 : vector<128x128xf32>
    %13 = vector.extract_strided_slice %6 {offsets = [0, 1, 0], sizes = [8, 16, 128], strides = [1, 1, 1]} : vector<8x18x128xf32> to vector<8x16x128xf32>
    %14 = vector.shape_cast %13 : vector<8x16x128xf32> to vector<128x128xf32>
    %c1 = arith.constant 1 : index
    %c0_11 = arith.constant 0 : index
    %c0_12 = arith.constant 0 : index
    %15 = vector.load %arg4[%c1, %c0_11, %c0_12] : memref<9x128x128xf32, #tpu.memory_space<vmem>>, vector<1x128x128xf32>
    %16 = vector.shape_cast %15 : vector<1x128x128xf32> to vector<128x128xf32>
    %cst_13 = arith.constant dense<0.000000e+00> : vector<128x128xf32>
    %17 = tpu.matmul %14, %16, %cst_13 {dimension_numbers = #tpu.dot_dimension_numbers<[1], [0], [0], [1], [0, 0, 1, 1], [], []>} : vector<128x128xf32>, vector<128x128xf32>, vector<128x128xf32> -> vector<128x128xf32>
    %18 = arith.addf %12, %17 : vector<128x128xf32>
    %19 = vector.extract_strided_slice %6 {offsets = [0, 2, 0], sizes = [8, 16, 128], strides = [1, 1, 1]} : vector<8x18x128xf32> to vector<8x16x128xf32>
    %20 = vector.shape_cast %19 : vector<8x16x128xf32> to vector<128x128xf32>
    %c2 = arith.constant 2 : index
    %c0_14 = arith.constant 0 : index
    %c0_15 = arith.constant 0 : index
    %21 = vector.load %arg4[%c2, %c0_14, %c0_15] : memref<9x128x128xf32, #tpu.memory_space<vmem>>, vector<1x128x128xf32>
    %22 = vector.shape_cast %21 : vector<1x128x128xf32> to vector<128x128xf32>
    %cst_16 = arith.constant dense<0.000000e+00> : vector<128x128xf32>
    %23 = tpu.matmul %20, %22, %cst_16 {dimension_numbers = #tpu.dot_dimension_numbers<[1], [0], [0], [1], [0, 0, 1, 1], [], []>} : vector<128x128xf32>, vector<128x128xf32>, vector<128x128xf32> -> vector<128x128xf32>
    %24 = arith.addf %18, %23 : vector<128x128xf32>
    %25 = vector.extract_strided_slice %4 {offsets = [1, 0, 0], sizes = [8, 18, 128], strides = [1, 1, 1]} : vector<16x18x128xf32> to vector<8x18x128xf32>
    %26 = vector.extract_strided_slice %25 {offsets = [0, 0, 0], sizes = [8, 16, 128], strides = [1, 1, 1]} : vector<8x18x128xf32> to vector<8x16x128xf32>
    %27 = vector.shape_cast %26 : vector<8x16x128xf32> to vector<128x128xf32>
    %c3 = arith.constant 3 : index
    %c0_17 = arith.constant 0 : index
    %c0_18 = arith.constant 0 : index
    %28 = vector.load %arg4[%c3, %c0_17, %c0_18] : memref<9x128x128xf32, #tpu.memory_space<vmem>>, vector<1x128x128xf32>
    %29 = vector.shape_cast %28 : vector<1x128x128xf32> to vector<128x128xf32>
    %cst_19 = arith.constant dense<0.000000e+00> : vector<128x128xf32>
    %30 = tpu.matmul %27, %29, %cst_19 {dimension_numbers = #tpu.dot_dimension_numbers<[1], [0], [0], [1], [0, 0, 1, 1], [], []>} : vector<128x128xf32>, vector<128x128xf32>, vector<128x128xf32> -> vector<128x128xf32>
    %31 = arith.addf %24, %30 : vector<128x128xf32>
    %32 = vector.extract_strided_slice %25 {offsets = [0, 1, 0], sizes = [8, 16, 128], strides = [1, 1, 1]} : vector<8x18x128xf32> to vector<8x16x128xf32>
    %33 = vector.shape_cast %32 : vector<8x16x128xf32> to vector<128x128xf32>
    %c4 = arith.constant 4 : index
    %c0_20 = arith.constant 0 : index
    %c0_21 = arith.constant 0 : index
    %34 = vector.load %arg4[%c4, %c0_20, %c0_21] : memref<9x128x128xf32, #tpu.memory_space<vmem>>, vector<1x128x128xf32>
    %35 = vector.shape_cast %34 : vector<1x128x128xf32> to vector<128x128xf32>
    %cst_22 = arith.constant dense<0.000000e+00> : vector<128x128xf32>
    %36 = tpu.matmul %33, %35, %cst_22 {dimension_numbers = #tpu.dot_dimension_numbers<[1], [0], [0], [1], [0, 0, 1, 1], [], []>} : vector<128x128xf32>, vector<128x128xf32>, vector<128x128xf32> -> vector<128x128xf32>
    %37 = arith.addf %31, %36 : vector<128x128xf32>
    %38 = vector.extract_strided_slice %25 {offsets = [0, 2, 0], sizes = [8, 16, 128], strides = [1, 1, 1]} : vector<8x18x128xf32> to vector<8x16x128xf32>
    %39 = vector.shape_cast %38 : vector<8x16x128xf32> to vector<128x128xf32>
    %c5 = arith.constant 5 : index
    %c0_23 = arith.constant 0 : index
    %c0_24 = arith.constant 0 : index
    %40 = vector.load %arg4[%c5, %c0_23, %c0_24] : memref<9x128x128xf32, #tpu.memory_space<vmem>>, vector<1x128x128xf32>
    %41 = vector.shape_cast %40 : vector<1x128x128xf32> to vector<128x128xf32>
    %cst_25 = arith.constant dense<0.000000e+00> : vector<128x128xf32>
    %42 = tpu.matmul %39, %41, %cst_25 {dimension_numbers = #tpu.dot_dimension_numbers<[1], [0], [0], [1], [0, 0, 1, 1], [], []>} : vector<128x128xf32>, vector<128x128xf32>, vector<128x128xf32> -> vector<128x128xf32>
    %43 = arith.addf %37, %42 : vector<128x128xf32>
    %44 = vector.extract_strided_slice %4 {offsets = [2, 0, 0], sizes = [8, 18, 128], strides = [1, 1, 1]} : vector<16x18x128xf32> to vector<8x18x128xf32>
    %45 = vector.extract_strided_slice %44 {offsets = [0, 0, 0], sizes = [8, 16, 128], strides = [1, 1, 1]} : vector<8x18x128xf32> to vector<8x16x128xf32>
    %46 = vector.shape_cast %45 : vector<8x16x128xf32> to vector<128x128xf32>
    %c6 = arith.constant 6 : index
    %c0_26 = arith.constant 0 : index
    %c0_27 = arith.constant 0 : index
    %47 = vector.load %arg4[%c6, %c0_26, %c0_27] : memref<9x128x128xf32, #tpu.memory_space<vmem>>, vector<1x128x128xf32>
    %48 = vector.shape_cast %47 : vector<1x128x128xf32> to vector<128x128xf32>
    %cst_28 = arith.constant dense<0.000000e+00> : vector<128x128xf32>
    %49 = tpu.matmul %46, %48, %cst_28 {dimension_numbers = #tpu.dot_dimension_numbers<[1], [0], [0], [1], [0, 0, 1, 1], [], []>} : vector<128x128xf32>, vector<128x128xf32>, vector<128x128xf32> -> vector<128x128xf32>
    %50 = arith.addf %43, %49 : vector<128x128xf32>
    %51 = vector.extract_strided_slice %44 {offsets = [0, 1, 0], sizes = [8, 16, 128], strides = [1, 1, 1]} : vector<8x18x128xf32> to vector<8x16x128xf32>
    %52 = vector.shape_cast %51 : vector<8x16x128xf32> to vector<128x128xf32>
    %c7 = arith.constant 7 : index
    %c0_29 = arith.constant 0 : index
    %c0_30 = arith.constant 0 : index
    %53 = vector.load %arg4[%c7, %c0_29, %c0_30] : memref<9x128x128xf32, #tpu.memory_space<vmem>>, vector<1x128x128xf32>
    %54 = vector.shape_cast %53 : vector<1x128x128xf32> to vector<128x128xf32>
    %cst_31 = arith.constant dense<0.000000e+00> : vector<128x128xf32>
    %55 = tpu.matmul %52, %54, %cst_31 {dimension_numbers = #tpu.dot_dimension_numbers<[1], [0], [0], [1], [0, 0, 1, 1], [], []>} : vector<128x128xf32>, vector<128x128xf32>, vector<128x128xf32> -> vector<128x128xf32>
    %56 = arith.addf %50, %55 : vector<128x128xf32>
    %57 = vector.extract_strided_slice %44 {offsets = [0, 2, 0], sizes = [8, 16, 128], strides = [1, 1, 1]} : vector<8x18x128xf32> to vector<8x16x128xf32>
    %58 = vector.shape_cast %57 : vector<8x16x128xf32> to vector<128x128xf32>
    %c8 = arith.constant 8 : index
    %c0_32 = arith.constant 0 : index
    %c0_33 = arith.constant 0 : index
    %59 = vector.load %arg4[%c8, %c0_32, %c0_33] : memref<9x128x128xf32, #tpu.memory_space<vmem>>, vector<1x128x128xf32>
    %60 = vector.shape_cast %59 : vector<1x128x128xf32> to vector<128x128xf32>
    %cst_34 = arith.constant dense<0.000000e+00> : vector<128x128xf32>
    %61 = tpu.matmul %58, %60, %cst_34 {dimension_numbers = #tpu.dot_dimension_numbers<[1], [0], [0], [1], [0, 0, 1, 1], [], []>} : vector<128x128xf32>, vector<128x128xf32>, vector<128x128xf32> -> vector<128x128xf32>
    %62 = arith.addf %56, %61 : vector<128x128xf32>
    %c0_35 = arith.constant 0 : index
    %c0_36 = arith.constant 0 : index
    %63 = vector.load %arg5[%c0_35, %c0_36] : memref<128x128xf32, #tpu.memory_space<vmem>>, vector<128x128xf32>
    tpu.vector_store %arg5[%c0_35, %c0_36], %62 {strides = array<i32>} : memref<128x128xf32, #tpu.memory_space<vmem>>, vector<128x128xf32>,
    %cst_37 = arith.constant dense<0.000000e+00> : vector<128xf32>
    %64 = vector.multi_reduction <add>, %62, %cst_37 [0] : vector<128x128xf32> to vector<128xf32>
    %65 = vector.shape_cast %64 : vector<128xf32> to vector<1x128xf32>
    %66 = arith.mulf %62, %62 : vector<128x128xf32>
    %cst_38 = arith.constant dense<0.000000e+00> : vector<128xf32>
    %67 = vector.multi_reduction <add>, %66, %cst_38 [0] : vector<128x128xf32> to vector<128xf32>
    %68 = vector.shape_cast %67 : vector<128xf32> to vector<1x128xf32>
    %69 = tpu.concatenate %65, %68 in 0 : vector<1x128xf32>, vector<1x128xf32> -> vector<2x128xf32>
    %70 = vector.shape_cast %69 : vector<2x128xf32> to vector<1x2x128xf32>
    %c0_39 = arith.constant 0 : index
    %c0_40 = arith.constant 0 : index
    %c0_41 = arith.constant 0 : index
    %71 = vector.load %arg6[%c0_39, %c0_40, %c0_41] : memref<1x2x128xf32, #tpu.memory_space<vmem>>, vector<1x2x128xf32>
    tpu.vector_store %arg6[%c0_39, %c0_40, %c0_41], %70 {strides = array<i32>} : memref<1x2x128xf32, #tpu.memory_space<vmem>>, vector<1x2x128xf32>,
    return
  }
  func.func @transform_0(%arg0: i32, %arg1: i32) -> (i32, i32, i32, i32) {
    %c0_i32 = arith.constant 0 : i32
    %c0_i32_0 = arith.constant 0 : i32
    %c0_i32_1 = arith.constant 0 : i32
    return %arg0, %arg1, %c0_i32, %c0_i32_0 : i32, i32, i32, i32
  }
  func.func @transform_1(%arg0: i32, %arg1: i32) -> (i32, i32, i32, i32) {
    %c1_i32 = arith.constant 1 : i32
    %0 = arith.addi %arg1, %c1_i32 : i32
    %c0_i32 = arith.constant 0 : i32
    %c0_i32_0 = arith.constant 0 : i32
    %c0_i32_1 = arith.constant 0 : i32
    return %arg0, %0, %c0_i32, %c0_i32_0 : i32, i32, i32, i32
  }
  func.func @transform_2(%arg0: i32, %arg1: i32) -> (i32, i32, i32) {
    %c0_i32 = arith.constant 0 : i32
    %c0_i32_0 = arith.constant 0 : i32
    %c0_i32_1 = arith.constant 0 : i32
    %c0_i32_2 = arith.constant 0 : i32
    return %c0_i32, %c0_i32_0, %c0_i32_1 : i32, i32, i32
  }
  func.func @transform_3(%arg0: i32, %arg1: i32) -> (i32, i32) {
    %c2_i32 = arith.constant 2 : i32
    %0 = arith.muli %arg0, %c2_i32 : i32
    %1 = arith.addi %0, %arg1 : i32
    %c0_i32 = arith.constant 0 : i32
    %c0_i32_0 = arith.constant 0 : i32
    return %1, %c0_i32 : i32, i32
  }
  func.func @transform_4(%arg0: i32, %arg1: i32) -> (i32, i32, i32) {
    %c2_i32 = arith.constant 2 : i32
    %0 = arith.muli %arg0, %c2_i32 : i32
    %1 = arith.addi %0, %arg1 : i32
    %c0_i32 = arith.constant 0 : i32
    %c0_i32_0 = arith.constant 0 : i32
    %c0_i32_1 = arith.constant 0 : i32
    return %1, %c0_i32, %c0_i32_0 : i32, i32, i32
  }
}

module attributes {stable_mosaic.version = 11 : i64} {
  func.func @_bn_relu_kernel(%arg0: i32, %arg1: memref<512x128xf32, #tpu.memory_space<vmem>>, %arg2: memref<1x128xf32, #tpu.memory_space<vmem>>, %arg3: memref<1x128xf32, #tpu.memory_space<vmem>>, %arg4: memref<512x128xf32, #tpu.memory_space<vmem>>) attributes {dimension_semantics = [#tpu.dimension_semantics<parallel>], iteration_bounds = array<i64: 1>, scalar_prefetch = 0 : i64, scratch_operands = 0 : i64, tpu.core_type = #tpu.core_type<tc>, window_params = [{transform_indices = @transform_0, window_bounds = array<i64: 512, 128>}, {pipeline_mode = #tpu.pipeline_mode<synchronous>, transform_indices = @transform_1, window_bounds = array<i64: 1, 128>}, {pipeline_mode = #tpu.pipeline_mode<synchronous>, transform_indices = @transform_2, window_bounds = array<i64: 1, 128>}, {transform_indices = @transform_3, window_bounds = array<i64: 512, 128>}]} {
    %c0 = arith.constant 0 : index
    %c0_0 = arith.constant 0 : index
    %0 = vector.load %arg1[%c0, %c0_0] : memref<512x128xf32, #tpu.memory_space<vmem>>, vector<512x128xf32>
    %c0_1 = arith.constant 0 : index
    %c0_2 = arith.constant 0 : index
    %1 = vector.load %arg2[%c0_1, %c0_2] : memref<1x128xf32, #tpu.memory_space<vmem>>, vector<1x128xf32>
    %2 = vector.broadcast %1 : vector<1x128xf32> to vector<512x128xf32>
    %3 = arith.mulf %0, %2 : vector<512x128xf32>
    %c0_3 = arith.constant 0 : index
    %c0_4 = arith.constant 0 : index
    %4 = vector.load %arg3[%c0_3, %c0_4] : memref<1x128xf32, #tpu.memory_space<vmem>>, vector<1x128xf32>
    %5 = vector.broadcast %4 : vector<1x128xf32> to vector<512x128xf32>
    %6 = arith.addf %3, %5 : vector<512x128xf32>
    %cst = arith.constant 0.000000e+00 : f32
    %7 = vector.broadcast %cst : f32 to vector<512x128xf32>
    %8 = arith.maximumf %6, %7 : vector<512x128xf32>
    %c0_5 = arith.constant 0 : index
    %c0_6 = arith.constant 0 : index
    %9 = vector.load %arg4[%c0_5, %c0_6] : memref<512x128xf32, #tpu.memory_space<vmem>>, vector<512x128xf32>
    tpu.vector_store %arg4[%c0_5, %c0_6], %8 {strides = array<i32>} : memref<512x128xf32, #tpu.memory_space<vmem>>, vector<512x128xf32>,
    return
  }
  func.func @transform_0(%arg0: i32) -> (i32, i32) {
    %c0_i32 = arith.constant 0 : i32
    %c0_i32_0 = arith.constant 0 : i32
    return %arg0, %c0_i32 : i32, i32
  }
  func.func @transform_1(%arg0: i32) -> (i32, i32) {
    %c0_i32 = arith.constant 0 : i32
    %c0_i32_0 = arith.constant 0 : i32
    %c0_i32_1 = arith.constant 0 : i32
    return %c0_i32, %c0_i32_0 : i32, i32
  }
  func.func @transform_2(%arg0: i32) -> (i32, i32) {
    %c0_i32 = arith.constant 0 : i32
    %c0_i32_0 = arith.constant 0 : i32
    %c0_i32_1 = arith.constant 0 : i32
    return %c0_i32, %c0_i32_0 : i32, i32
  }
  func.func @transform_3(%arg0: i32) -> (i32, i32) {
    %c0_i32 = arith.constant 0 : i32
    %c0_i32_0 = arith.constant 0 : i32
    return %arg0, %c0_i32 : i32, i32
  }
}

</mosaic_0001>

<llo_original>
// kernel: double_conv.5
$region0: #{double_conv.5}
  #allocation0 [shape = 'u32[]', space=smem, size = 0x4, offset = 0x4, fixed_abs, tag = 'smem constant byte address 0x4 - core index']
  #allocation1 [shape = 'u32[144,128]{1,0:T(1,128)}', space=vmem, size = 0x12000, scoped, tag = 'internal scratch']
  %s0 = inlined_call_operand.vmem [shape: f32[512,128], index: 0, kind: input, shape index: {}]
  %s1 = inlined_call_operand.vmem [shape: f32[1,128], index: 1, kind: input, shape index: {}]
  %s2 = inlined_call_operand.vmem [shape: f32[1,128], index: 2, kind: input, shape index: {}]
  %s3 = inlined_call_operand.vmem [shape: f32[512,128], index: 3, kind: output, shape index: {}]
  %s4 = sld [smem:[#allocation0]]
  $region22: #{double_conv.5} parent=0
    _
  %s6 = ssub.s32 1, %s4
  %s7 = scalar_select 0, %s6, %s4
  // Predicated region
  $region2: #{double_conv.5} parent=0 // pred_check
    _
  $region3: #{double_conv.5} parent=0 // pred_check_branch
    %9 = sbr.rel (0) target = $region5
  $region4: #{double_conv.5} parent=0 // pred_region
    _
  $region5: #{double_conv.5} parent=0 // pred_fallthru
    _
  // Predicated region
  $region6: #{double_conv.5} parent=0 // pred_check
    _
  $region7: #{double_conv.5} parent=0 // pred_check_branch
    %11 = sbr.rel (0) target = $region9
  $region8: #{double_conv.5} parent=0 // pred_region
    _
  $region9: #{double_conv.5} parent=0 // pred_fallthru
    _
  // Predicated region
  $region10: #{double_conv.5} parent=0 // pred_check
    _
  $region11: #{double_conv.5} parent=0 // pred_check_branch
    %13 = sbr.rel (0) target = $region13
  $region12: #{double_conv.5} parent=0 // pred_region
    _
  $region13: #{double_conv.5} parent=0 // pred_fallthru
    _
  %v14 = vld [vmem:[%s0] sm:$0xff]
  %v15 = vld [vmem:[%s0 + $0x8] sm:$0xff]
  %v16 = vld [vmem:[%s0 + $0x10] sm:$0xff]
  %v17 = vld [vmem:[%s0 + $0x18] sm:$0xff]
  %v18 = vld [vmem:[%s0 + $0x20] sm:$0xff]
  %v19 = vld [vmem:[%s0 + $0x28] sm:$0xff]
  %v20 = vld [vmem:[%s0 + $0x30] sm:$0xff]
  %v21 = vld [vmem:[%s0 + $0x38] sm:$0xff]
  %v22 = vld [vmem:[%s0 + $0x40] sm:$0xff]
  %v23 = vld [vmem:[%s0 + $0x48] sm:$0xff]
  %v24 = vld [vmem:[%s0 + $0x50] sm:$0xff]
  %v25 = vld [vmem:[%s0 + $0x58] sm:$0xff]
  %v26 = vld [vmem:[%s0 + $0x60] sm:$0xff]
  %v27 = vld [vmem:[%s0 + $0x68] sm:$0xff]
  %v28 = vld [vmem:[%s0 + $0x70] sm:$0xff]
  %v29 = vld [vmem:[%s0 + $0x78] sm:$0xff]
  %v30 = vld [vmem:[%s0 + $0x80] sm:$0xff]
  %v31 = vld [vmem:[%s0 + $0x88] sm:$0xff]
  %v32 = vld [vmem:[%s0 + $0x90] sm:$0xff]
  %v33 = vld [vmem:[%s0 + $0x98] sm:$0xff]
  %v34 = vld [vmem:[%s0 + $0xa0] sm:$0xff]
  %v35 = vld [vmem:[%s0 + $0xa8] sm:$0xff]
  %v36 = vld [vmem:[%s0 + $0xb0] sm:$0xff]
  %v37 = vld [vmem:[%s0 + $0xb8] sm:$0xff]
  %v38 = vld [vmem:[%s0 + $0xc0] sm:$0xff]
  %v39 = vld [vmem:[%s0 + $0xc8] sm:$0xff]
  %v40 = vld [vmem:[%s0 + $0xd0] sm:$0xff]
  %v41 = vld [vmem:[%s0 + $0xd8] sm:$0xff]
  %v42 = vld [vmem:[%s0 + $0xe0] sm:$0xff]
  %v43 = vld [vmem:[%s0 + $0xe8] sm:$0xff]
  %v44 = vld [vmem:[%s0 + $0xf0] sm:$0xff]
  %v45 = vld [vmem:[%s0 + $0xf8] sm:$0xff]
  %v46 = vld [vmem:[%s0 + $0x100] sm:$0xff]
  %v47 = vld [vmem:[%s0 + $0x108] sm:$0xff]
  %v48 = vld [vmem:[%s0 + $0x110] sm:$0xff]
  %v49 = vld [vmem:[%s0 + $0x118] sm:$0xff]
  %v50 = vld [vmem:[%s0 + $0x120] sm:$0xff]
  %v51 = vld [vmem:[%s0 + $0x128] sm:$0xff]
  %v52 = vld [vmem:[%s0 + $0x130] sm:$0xff]
  %v53 = vld [vmem:[%s0 + $0x138] sm:$0xff]
  %v54 = vld [vmem:[%s0 + $0x140] sm:$0xff]
  %v55 = vld [vmem:[%s0 + $0x148] sm:$0xff]
  %v56 = vld [vmem:[%s0 + $0x150] sm:$0xff]
  %v57 = vld [vmem:[%s0 + $0x158] sm:$0xff]
  %v58 = vld [vmem:[%s0 + $0x160] sm:$0xff]
  %v59 = vld [vmem:[%s0 + $0x168] sm:$0xff]
  %v60 = vld [vmem:[%s0 + $0x170] sm:$0xff]
  %v61 = vld [vmem:[%s0 + $0x178] sm:$0xff]
  %v62 = vld [vmem:[%s0 + $0x180] sm:$0xff]
  %v63 = vld [vmem:[%s0 + $0x188] sm:$0xff]
  %v64 = vld [vmem:[%s0 + $0x190] sm:$0xff]
  %v65 = vld [vmem:[%s0 + $0x198] sm:$0xff]
  %v66 = vld [vmem:[%s0 + $0x1a0] sm:$0xff]
  %v67 = vld [vmem:[%s0 + $0x1a8] sm:$0xff]
  %v68 = vld [vmem:[%s0 + $0x1b0] sm:$0xff]
  %v69 = vld [vmem:[%s0 + $0x1b8] sm:$0xff]
  %v70 = vld [vmem:[%s0 + $0x1c0] sm:$0xff]
  %v71 = vld [vmem:[%s0 + $0x1c8] sm:$0xff]
  %v72 = vld [vmem:[%s0 + $0x1d0] sm:$0xff]
  %v73 = vld [vmem:[%s0 + $0x1d8] sm:$0xff]
  %v74 = vld [vmem:[%s0 + $0x1e0] sm:$0xff]
  %v75 = vld [vmem:[%s0 + $0x1e8] sm:$0xff]
  %v76 = vld [vmem:[%s0 + $0x1f0] sm:$0xff]
  %v77 = vld [vmem:[%s0 + $0x1f8] sm:$0xff]
  %v78 = vld [vmem:[%s1] sm:$0x1]
  %v80 = vlaneseq
  %v81 = vshrl.u32 %v80, 7
  %v82 = vsub.s32 0, %v81
  %v83 = vrot.slane %v78, %v82
  %v85 = vmul.f32 %v14, %v83
  %v86 = vmul.f32 %v15, %v83
  %v87 = vmul.f32 %v16, %v83
  %v88 = vmul.f32 %v17, %v83
  %v89 = vmul.f32 %v18, %v83
  %v90 = vmul.f32 %v19, %v83
  %v91 = vmul.f32 %v20, %v83
  %v92 = vmul.f32 %v21, %v83
  %v93 = vmul.f32 %v22, %v83
  %v94 = vmul.f32 %v23, %v83
  %v95 = vmul.f32 %v24, %v83
  %v96 = vmul.f32 %v25, %v83
  %v97 = vmul.f32 %v26, %v83
  %v98 = vmul.f32 %v27, %v83
  %v99 = vmul.f32 %v28, %v83
  %v100 = vmul.f32 %v29, %v83
  %v101 = vmul.f32 %v30, %v83
  %v102 = vmul.f32 %v31, %v83
  %v103 = vmul.f32 %v32, %v83
  %v104 = vmul.f32 %v33, %v83
  %v105 = vmul.f32 %v34, %v83
  %v106 = vmul.f32 %v35, %v83
  %v107 = vmul.f32 %v36, %v83
  %v108 = vmul.f32 %v37, %v83
  %v109 = vmul.f32 %v38, %v83
  %v110 = vmul.f32 %v39, %v83
  %v111 = vmul.f32 %v40, %v83
  %v112 = vmul.f32 %v41, %v83
  %v113 = vmul.f32 %v42, %v83
  %v114 = vmul.f32 %v43, %v83
  %v115 = vmul.f32 %v44, %v83
  %v116 = vmul.f32 %v45, %v83
  %v117 = vmul.f32 %v46, %v83
  %v118 = vmul.f32 %v47, %v83
  %v119 = vmul.f32 %v48, %v83
  %v120 = vmul.f32 %v49, %v83
  %v121 = vmul.f32 %v50, %v83
  %v122 = vmul.f32 %v51, %v83
  %v123 = vmul.f32 %v52, %v83
  %v124 = vmul.f32 %v53, %v83
  %v125 = vmul.f32 %v54, %v83
  %v126 = vmul.f32 %v55, %v83
  %v127 = vmul.f32 %v56, %v83
  %v128 = vmul.f32 %v57, %v83
  %v129 = vmul.f32 %v58, %v83
  %v130 = vmul.f32 %v59, %v83
  %v131 = vmul.f32 %v60, %v83
  %v132 = vmul.f32 %v61, %v83
  %v133 = vmul.f32 %v62, %v83
  %v134 = vmul.f32 %v63, %v83
  %v135 = vmul.f32 %v64, %v83
  %v136 = vmul.f32 %v65, %v83
  %v137 = vmul.f32 %v66, %v83
  %v138 = vmul.f32 %v67, %v83
  %v139 = vmul.f32 %v68, %v83
  %v140 = vmul.f32 %v69, %v83
  %v141 = vmul.f32 %v70, %v83
  %v142 = vmul.f32 %v71, %v83
  %v143 = vmul.f32 %v72, %v83
  %v144 = vmul.f32 %v73, %v83
  %v145 = vmul.f32 %v74, %v83
  %v146 = vmul.f32 %v75, %v83
  %v147 = vmul.f32 %v76, %v83
  %v148 = vmul.f32 %v77, %v83
  %v149 = vld [vmem:[%s2] sm:$0x1]
  %v151 = vlaneseq
  %v152 = vshrl.u32 %v151, 7
  %v153 = vsub.s32 0, %v152
  %v154 = vrot.slane %v149, %v153
  %v156 = vadd.f32 %v85, %v154
  %v157 = vadd.f32 %v86, %v154
  %v158 = vadd.f32 %v87, %v154
  %v159 = vadd.f32 %v88, %v154
  %v160 = vadd.f32 %v89, %v154
  %v161 = vadd.f32 %v90, %v154
  %v162 = vadd.f32 %v91, %v154
  %v163 = vadd.f32 %v92, %v154
  %v164 = vadd.f32 %v93, %v154
  %v165 = vadd.f32 %v94, %v154
  %v166 = vadd.f32 %v95, %v154
  %v167 = vadd.f32 %v96, %v154
  %v168 = vadd.f32 %v97, %v154
  %v169 = vadd.f32 %v98, %v154
  %v170 = vadd.f32 %v99, %v154
  %v171 = vadd.f32 %v100, %v154
  %v172 = vadd.f32 %v101, %v154
  %v173 = vadd.f32 %v102, %v154
  %v174 = vadd.f32 %v103, %v154
  %v175 = vadd.f32 %v104, %v154
  %v176 = vadd.f32 %v105, %v154
  %v177 = vadd.f32 %v106, %v154
  %v178 = vadd.f32 %v107, %v154
  %v179 = vadd.f32 %v108, %v154
  %v180 = vadd.f32 %v109, %v154
  %v181 = vadd.f32 %v110, %v154
  %v182 = vadd.f32 %v111, %v154
  %v183 = vadd.f32 %v112, %v154
  %v184 = vadd.f32 %v113, %v154
  %v185 = vadd.f32 %v114, %v154
  %v186 = vadd.f32 %v115, %v154
  %v187 = vadd.f32 %v116, %v154
  %v188 = vadd.f32 %v117, %v154
  %v189 = vadd.f32 %v118, %v154
  %v190 = vadd.f32 %v119, %v154
  %v191 = vadd.f32 %v120, %v154
  %v192 = vadd.f32 %v121, %v154
  %v193 = vadd.f32 %v122, %v154
  %v194 = vadd.f32 %v123, %v154
  %v195 = vadd.f32 %v124, %v154
  %v196 = vadd.f32 %v125, %v154
  %v197 = vadd.f32 %v126, %v154
  %v198 = vadd.f32 %v127, %v154
  %v199 = vadd.f32 %v128, %v154
  %v200 = vadd.f32 %v129, %v154
  %v201 = vadd.f32 %v130, %v154
  %v202 = vadd.f32 %v131, %v154
  %v203 = vadd.f32 %v132, %v154
  %v204 = vadd.f32 %v133, %v154
  %v205 = vadd.f32 %v134, %v154
  %v206 = vadd.f32 %v135, %v154
  %v207 = vadd.f32 %v136, %v154
  %v208 = vadd.f32 %v137, %v154
  %v209 = vadd.f32 %v138, %v154
  %v210 = vadd.f32 %v139, %v154
  %v211 = vadd.f32 %v140, %v154
  %v212 = vadd.f32 %v141, %v154
  %v213 = vadd.f32 %v142, %v154
  %v214 = vadd.f32 %v143, %v154
  %v215 = vadd.f32 %v144, %v154
  %v216 = vadd.f32 %v145, %v154
  %v217 = vadd.f32 %v146, %v154
  %v218 = vadd.f32 %v147, %v154
  %v219 = vadd.f32 %v148, %v154
  %v220 = vmax.f32 %v156, 0.0
  %v221 = vmax.f32 %v157, 0.0
  %v222 = vmax.f32 %v158, 0.0
  %v223 = vmax.f32 %v159, 0.0
  %v224 = vmax.f32 %v160, 0.0
  %v225 = vmax.f32 %v161, 0.0
  %v226 = vmax.f32 %v162, 0.0
  %v227 = vmax.f32 %v163, 0.0
  %v228 = vmax.f32 %v164, 0.0
  %v229 = vmax.f32 %v165, 0.0
  %v230 = vmax.f32 %v166, 0.0
  %v231 = vmax.f32 %v167, 0.0
  %v232 = vmax.f32 %v168, 0.0
  %v233 = vmax.f32 %v169, 0.0
  %v234 = vmax.f32 %v170, 0.0
  %v235 = vmax.f32 %v171, 0.0
  %v236 = vmax.f32 %v172, 0.0
  %v237 = vmax.f32 %v173, 0.0
  %v238 = vmax.f32 %v174, 0.0
  %v239 = vmax.f32 %v175, 0.0
  %v240 = vmax.f32 %v176, 0.0
  %v241 = vmax.f32 %v177, 0.0
  %v242 = vmax.f32 %v178, 0.0
  %v243 = vmax.f32 %v179, 0.0
  %v244 = vmax.f32 %v180, 0.0
  %v245 = vmax.f32 %v181, 0.0
  %v246 = vmax.f32 %v182, 0.0
  %v247 = vmax.f32 %v183, 0.0
  %v248 = vmax.f32 %v184, 0.0
  %v249 = vmax.f32 %v185, 0.0
  %v250 = vmax.f32 %v186, 0.0
  %v251 = vmax.f32 %v187, 0.0
  %v252 = vmax.f32 %v188, 0.0
  %v253 = vmax.f32 %v189, 0.0
  %v254 = vmax.f32 %v190, 0.0
  %v255 = vmax.f32 %v191, 0.0
  %v256 = vmax.f32 %v192, 0.0
  %v257 = vmax.f32 %v193, 0.0
  %v258 = vmax.f32 %v194, 0.0
  %v259 = vmax.f32 %v195, 0.0
  %v260 = vmax.f32 %v196, 0.0
  %v261 = vmax.f32 %v197, 0.0
  %v262 = vmax.f32 %v198, 0.0
  %v263 = vmax.f32 %v199, 0.0
  %v264 = vmax.f32 %v200, 0.0
  %v265 = vmax.f32 %v201, 0.0
  %v266 = vmax.f32 %v202, 0.0
  %v267 = vmax.f32 %v203, 0.0
  %v268 = vmax.f32 %v204, 0.0
  %v269 = vmax.f32 %v205, 0.0
  %v270 = vmax.f32 %v206, 0.0
  %v271 = vmax.f32 %v207, 0.0
  %v272 = vmax.f32 %v208, 0.0
  %v273 = vmax.f32 %v209, 0.0
  %v274 = vmax.f32 %v210, 0.0
  %v275 = vmax.f32 %v211, 0.0
  %v276 = vmax.f32 %v212, 0.0
  %v277 = vmax.f32 %v213, 0.0
  %v278 = vmax.f32 %v214, 0.0
  %v279 = vmax.f32 %v215, 0.0
  %v280 = vmax.f32 %v216, 0.0
  %v281 = vmax.f32 %v217, 0.0
  %v282 = vmax.f32 %v218, 0.0
  %v283 = vmax.f32 %v219, 0.0
  %284 = vst [vmem:[%s3] sm:$0xff] %v220
  %285 = vst [vmem:[%s3 + $0x8] sm:$0xff] %v221
  %286 = vst [vmem:[%s3 + $0x10] sm:$0xff] %v222
  %287 = vst [vmem:[%s3 + $0x18] sm:$0xff] %v223
  %288 = vst [vmem:[%s3 + $0x20] sm:$0xff] %v224
  %289 = vst [vmem:[%s3 + $0x28] sm:$0xff] %v225
  %290 = vst [vmem:[%s3 + $0x30] sm:$0xff] %v226
  %291 = vst [vmem:[%s3 + $0x38] sm:$0xff] %v227
  %292 = vst [vmem:[%s3 + $0x40] sm:$0xff] %v228
  %293 = vst [vmem:[%s3 + $0x48] sm:$0xff] %v229
  %294 = vst [vmem:[%s3 + $0x50] sm:$0xff] %v230
  %295 = vst [vmem:[%s3 + $0x58] sm:$0xff] %v231
  %296 = vst [vmem:[%s3 + $0x60] sm:$0xff] %v232
  %297 = vst [vmem:[%s3 + $0x68] sm:$0xff] %v233
  %298 = vst [vmem:[%s3 + $0x70] sm:$0xff] %v234
  %299 = vst [vmem:[%s3 + $0x78] sm:$0xff] %v235
  %300 = vst [vmem:[%s3 + $0x80] sm:$0xff] %v236
  %301 = vst [vmem:[%s3 + $0x88] sm:$0xff] %v237
  %302 = vst [vmem:[%s3 + $0x90] sm:$0xff] %v238
  %303 = vst [vmem:[%s3 + $0x98] sm:$0xff] %v239
  %304 = vst [vmem:[%s3 + $0xa0] sm:$0xff] %v240
  %305 = vst [vmem:[%s3 + $0xa8] sm:$0xff] %v241
  %306 = vst [vmem:[%s3 + $0xb0] sm:$0xff] %v242
  %307 = vst [vmem:[%s3 + $0xb8] sm:$0xff] %v243
  %308 = vst [vmem:[%s3 + $0xc0] sm:$0xff] %v244
  %309 = vst [vmem:[%s3 + $0xc8] sm:$0xff] %v245
  %310 = vst [vmem:[%s3 + $0xd0] sm:$0xff] %v246
  %311 = vst [vmem:[%s3 + $0xd8] sm:$0xff] %v247
  %312 = vst [vmem:[%s3 + $0xe0] sm:$0xff] %v248
  %313 = vst [vmem:[%s3 + $0xe8] sm:$0xff] %v249
  %314 = vst [vmem:[%s3 + $0xf0] sm:$0xff] %v250
  %315 = vst [vmem:[%s3 + $0xf8] sm:$0xff] %v251
  %316 = vst [vmem:[%s3 + $0x100] sm:$0xff] %v252
  %317 = vst [vmem:[%s3 + $0x108] sm:$0xff] %v253
  %318 = vst [vmem:[%s3 + $0x110] sm:$0xff] %v254
  %319 = vst [vmem:[%s3 + $0x118] sm:$0xff] %v255
  %320 = vst [vmem:[%s3 + $0x120] sm:$0xff] %v256
  %321 = vst [vmem:[%s3 + $0x128] sm:$0xff] %v257
  %322 = vst [vmem:[%s3 + $0x130] sm:$0xff] %v258
  %323 = vst [vmem:[%s3 + $0x138] sm:$0xff] %v259
  %324 = vst [vmem:[%s3 + $0x140] sm:$0xff] %v260
  %325 = vst [vmem:[%s3 + $0x148] sm:$0xff] %v261
  %326 = vst [vmem:[%s3 + $0x150] sm:$0xff] %v262
  %327 = vst [vmem:[%s3 + $0x158] sm:$0xff] %v263
  %328 = vst [vmem:[%s3 + $0x160] sm:$0xff] %v264
  %329 = vst [vmem:[%s3 + $0x168] sm:$0xff] %v265
  %330 = vst [vmem:[%s3 + $0x170] sm:$0xff] %v266
  %331 = vst [vmem:[%s3 + $0x178] sm:$0xff] %v267
  %332 = vst [vmem:[%s3 + $0x180] sm:$0xff] %v268
  %333 = vst [vmem:[%s3 + $0x188] sm:$0xff] %v269
  %334 = vst [vmem:[%s3 + $0x190] sm:$0xff] %v270
  %335 = vst [vmem:[%s3 + $0x198] sm:$0xff] %v271
  %336 = vst [vmem:[%s3 + $0x1a0] sm:$0xff] %v272
  %337 = vst [vmem:[%s3 + $0x1a8] sm:$0xff] %v273
  %338 = vst [vmem:[%s3 + $0x1b0] sm:$0xff] %v274
  %339 = vst [vmem:[%s3 + $0x1b8] sm:$0xff] %v275
  %340 = vst [vmem:[%s3 + $0x1c0] sm:$0xff] %v276
  %341 = vst [vmem:[%s3 + $0x1c8] sm:$0xff] %v277
  %342 = vst [vmem:[%s3 + $0x1d0] sm:$0xff] %v278
  %343 = vst [vmem:[%s3 + $0x1d8] sm:$0xff] %v279
  %344 = vst [vmem:[%s3 + $0x1e0] sm:$0xff] %v280
  %345 = vst [vmem:[%s3 + $0x1e8] sm:$0xff] %v281
  %346 = vst [vmem:[%s3 + $0x1f0] sm:$0xff] %v282
  %347 = vst [vmem:[%s3 + $0x1f8] sm:$0xff] %v283
  // Predicated region
  $region14: #{double_conv.5} parent=0 // pred_check
    _
  $region15: #{double_conv.5} parent=0 // pred_check_branch
    %349 = sbr.rel (0) target = $region17
  $region16: #{double_conv.5} parent=0 // pred_region
    _
  $region17: #{double_conv.5} parent=0 // pred_fallthru
    _
  // Predicated region
  $region18: #{double_conv.5} parent=0 // pred_check
    _
  $region19: #{double_conv.5} parent=0 // pred_check_branch
    %351 = sbr.rel (0) target = $region21
  $region20: #{double_conv.5} parent=0 // pred_region
    _
  $region21: #{double_conv.5} parent=0 // pred_fallthru
    _

// kernel: double_conv.4
$region0: #{double_conv.4}
  #allocation0 [shape = 'u32[]', space=smem, size = 0x4, offset = 0x4, fixed_abs, tag = 'smem constant byte address 0x4 - core index']
  #allocation1 [shape = 'u32[144,128]{1,0:T(1,128)}', space=vmem, size = 0x12000, scoped, tag = 'internal scratch']
  %s0 = inlined_call_operand.vmem [shape: f32[2,24,18,128], index: 0, kind: input, shape index: {}, may-alias: {0,1}]
  %s1 = inlined_call_operand.vmem [shape: f32[2,24,18,128], index: 1, kind: input, shape index: {}, may-alias: {0,1}]
  %s2 = inlined_call_operand.vmem [shape: f32[9,128,128], index: 2, kind: input, shape index: {}]
  %s3 = inlined_call_operand.vmem [shape: f32[512,128], index: 3, kind: output, shape index: {0}]
  %s4 = inlined_call_operand.vmem [shape: f32[4,2,128], index: 4, kind: output, shape index: {1}]
  %5 = xla_tuple %s3, %s4
  %s6 = sld [smem:[#allocation0]]
  $region53: #{double_conv.4} parent=0
    _
  %s8 = ssub.s32 1, %s6
  %s9 = scalar_select 0, %s8, %s6
  loop: start=0, step=1, limit=6
  $region2: #{double_conv.4} parent=0 // loop_pre_header
    _
  $region3: #{double_conv.4} parent=0 // loop_header
    %s11 = sphi 0, %s15
    %p12 = scmp.ge.s32.totalorder %s11, 6
    %s18 = sphi 0, %s30
    %s19 = sphi 0, %s26
    %s20 = sphi 0, %s18
    %s21 = sphi 0, %s19
    %s22 = sphi 0, %s20
    %s23 = sphi 0, %s21
    %s35 = sphi 0, %s37
    %s38 = sphi 0, %s35
    %s39 = sphi 0, %s38
    %s55 = sphi 0, %s39
    %s65 = sphi 0, %s67
    %s68 = sphi 0, %s65
    %s69 = sphi 0, %s68
    %s85 = sphi 0, %s69
    %s89 = sphi 0, %s89
    %s91 = sphi 0, %s89
    %s92 = sphi 0, %s91
    %s106 = sphi 0, %s92
    %s116 = sphi 0, %s118
    %s119 = sphi 0, %s116
    %s120 = sphi 0, %s119
    %s136 = sphi 0, %s120
    %s146 = sphi 0, %s148
    %s149 = sphi 0, %s146
    %s150 = sphi 0, %s149
    %s166 = sphi 0, %s150
  $region4: #{double_conv.4} parent=0 // loop_header_branch
    %14 = sbr.rel (%p12) target = $region8
  $region5: #{double_conv.4} parent=0 // loop_body
    %s16 = ssub.s32 %s11, 1
    %s17 = ssub.s32 %s11, 2
    %s24 = sadd.s32 1, %s19
    %p25 = scmp.ge.s32.totalorder %s24, 2
    %s26 = scalar_select %p25, 0, %s24
    %s27 = sadd.s32 1, %s18
    %s28 = scalar_select %p25, %s27, %s18
    %p29 = scmp.ge.s32.totalorder %s28, 2
    %s30 = scalar_select %p29, 0, %s28
    %s31 = ssub.s32 %s18, %s30
    %s32 = ssub.s32 %s19, %s26
    %s33 = sor.u32 %s31, %s32
    %p34 = scmp.eq.s32.totalorder %s33, 0
    %s36 = sadd.s32 %s35, 1
    %s37 = scalar_select %p34, %s35, %s36
    %p40 = pneg %p34
    %p41 = scmp.eq.s32.totalorder %s11, 3
    %p42 = por %p40, %p41
    %p43 = scmp.ne.s32.totalorder %s35, %s38
    %p44 = scmp.eq.s32.totalorder %s11, 0
    %p45 = por %p43, %p44
    %p46 = scmp.ne.s32.totalorder %s35, %s38
    %p47 = scmp.eq.s32.totalorder %s16, 3
    %p48 = por %p46, %p47
    %p49 = scmp.ne.s32.totalorder %s38, %s39
    %p50 = scmp.eq.s32.totalorder %s16, 0
    %p51 = por %p49, %p50
    %p52 = scmp.ne.s32.totalorder %s38, %s39
    %p53 = scmp.eq.s32.totalorder %s17, 3
    %p54 = por %p52, %p53
    %p56 = scmp.ne.s32.totalorder %s39, %s55
    %p57 = scmp.eq.s32.totalorder %s17, 0
    %p58 = por %p56, %p57
    %s59 = sadd.s32 %s19, 1
    %s60 = sadd.s32 %s26, 1
    %s61 = ssub.s32 %s18, %s30
    %s62 = ssub.s32 %s59, %s60
    %s63 = sor.u32 %s61, %s62
    %p64 = scmp.eq.s32.totalorder %s63, 0
    %s66 = sadd.s32 %s65, 1
    %s67 = scalar_select %p64, %s65, %s66
    %p70 = pneg %p64
    %p71 = scmp.eq.s32.totalorder %s11, 3
    %p72 = por %p70, %p71
    %p73 = scmp.ne.s32.totalorder %s65, %s68
    %p74 = scmp.eq.s32.totalorder %s11, 0
    %p75 = por %p73, %p74
    %p76 = scmp.ne.s32.totalorder %s65, %s68
    %p77 = scmp.eq.s32.totalorder %s16, 3
    %p78 = por %p76, %p77
    %p79 = scmp.ne.s32.totalorder %s68, %s69
    %p80 = scmp.eq.s32.totalorder %s16, 0
    %p81 = por %p79, %p80
    %p82 = scmp.ne.s32.totalorder %s68, %s69
    %p83 = scmp.eq.s32.totalorder %s17, 3
    %p84 = por %p82, %p83
    %p86 = scmp.ne.s32.totalorder %s69, %s85
    %p87 = scmp.eq.s32.totalorder %s17, 0
    %p88 = por %p86, %p87
    %s90 = sadd.s32 %s89, 1
    %p93 = scmp.eq.s32.totalorder %s11, 3
    %p94 = scmp.ne.s32.totalorder %s89, %s91
    %p95 = scmp.eq.s32.totalorder %s11, 0
    %p96 = por %p94, %p95
    %p97 = scmp.ne.s32.totalorder %s89, %s91
    %p98 = scmp.eq.s32.totalorder %s16, 3
    %p99 = por %p97, %p98
    %p100 = scmp.ne.s32.totalorder %s91, %s92
    %p101 = scmp.eq.s32.totalorder %s16, 0
    %p102 = por %p100, %p101
    %p103 = scmp.ne.s32.totalorder %s91, %s92
    %p104 = scmp.eq.s32.totalorder %s17, 3
    %p105 = por %p103, %p104
    %p107 = scmp.ne.s32.totalorder %s92, %s106
    %p108 = scmp.eq.s32.totalorder %s17, 0
    %p109 = por %p107, %p108
    %s110 = smul.u32 %s18, 2
    %s111 = sadd.s32 %s110, %s19
    %s112 = smul.u32 %s30, 2
    %s113 = sadd.s32 %s112, %s26
    %s114 = ssub.s32 %s111, %s113
    %p115 = scmp.eq.s32.totalorder %s114, 0
    %s117 = sadd.s32 %s116, 1
    %s118 = scalar_select %p115, %s116, %s117
    %p121 = pneg %p115
    %p122 = scmp.eq.s32.totalorder %s11, 3
    %p123 = por %p121, %p122
    %p124 = scmp.ne.s32.totalorder %s116, %s119
    %p125 = scmp.eq.s32.totalorder %s11, 0
    %p126 = por %p124, %p125
    %p127 = scmp.ne.s32.totalorder %s116, %s119
    %p128 = scmp.eq.s32.totalorder %s16, 3
    %p129 = por %p127, %p128
    %p130 = scmp.ne.s32.totalorder %s119, %s120
    %p131 = scmp.eq.s32.totalorder %s16, 0
    %p132 = por %p130, %p131
    %p133 = scmp.ne.s32.totalorder %s119, %s120
    %p134 = scmp.eq.s32.totalorder %s17, 3
    %p135 = por %p133, %p134
    %p137 = scmp.ne.s32.totalorder %s120, %s136
    %p138 = scmp.eq.s32.totalorder %s17, 0
    %p139 = por %p137, %p138
    %s140 = smul.u32 %s18, 2
    %s141 = sadd.s32 %s140, %s19
    %s142 = smul.u32 %s30, 2
    %s143 = sadd.s32 %s142, %s26
    %s144 = ssub.s32 %s141, %s143
    %p145 = scmp.eq.s32.totalorder %s144, 0
    %s147 = sadd.s32 %s146, 1
    %s148 = scalar_select %p145, %s146, %s147
    %p151 = pneg %p145
    %p152 = scmp.eq.s32.totalorder %s11, 3
    %p153 = por %p151, %p152
    %p154 = scmp.ne.s32.totalorder %s146, %s149
    %p155 = scmp.eq.s32.totalorder %s11, 0
    %p156 = por %p154, %p155
    %p157 = scmp.ne.s32.totalorder %s146, %s149
    %p158 = scmp.eq.s32.totalorder %s16, 3
    %p159 = por %p157, %p158
    %p160 = scmp.ne.s32.totalorder %s149, %s150
    %p161 = scmp.eq.s32.totalorder %s16, 0
    %p162 = por %p160, %p161
    %p163 = scmp.ne.s32.totalorder %s149, %s150
    %p164 = scmp.eq.s32.totalorder %s17, 3
    %p165 = por %p163, %p164
    %p167 = scmp.ne.s32.totalorder %s150, %s166
    %p168 = scmp.eq.s32.totalorder %s17, 0
    %p169 = por %p167, %p168
    %p170 = scmp.le.s32.totalorder 1, %s11
    %p171 = scmp.lt.s32.totalorder %s11, 5
    %p172 = pnand %p170, %p171
    %p173 = pneg %p172
    // Predicated region
    $region9: #{double_conv.4} parent=5 // pred_check
      _
    $region10: #{double_conv.4} parent=5 // pred_check_branch
      %175 = sbr.rel (%p172) target = $region12
    $region11: #{double_conv.4} parent=5 // pred_region
      %s176 = ssub.s32 %s11, 1
      // Predicated region
      $region13: #{double_conv.4} parent=11 // pred_check
        %p177 = pneg %p102
      $region14: #{double_conv.4} parent=11 // pred_check_branch
        %179 = sbr.rel (%p177) target = $region16
      $region15: #{double_conv.4} parent=11 // pred_region
        _
      $region16: #{double_conv.4} parent=11 // pred_fallthru
        _
    $region12: #{double_conv.4} parent=5 // pred_fallthru
      _
    %p180 = scmp.lt.s32.totalorder %s11, 4
    // Predicated region
    $region17: #{double_conv.4} parent=5 // pred_check
      %p181 = pneg %p180
    $region18: #{double_conv.4} parent=5 // pred_check_branch
      %183 = sbr.rel (%p181) target = $region20
    $region19: #{double_conv.4} parent=5 // pred_region
      // Predicated region
      $region21: #{double_conv.4} parent=19 // pred_check
        %p184 = pneg %p45
      $region22: #{double_conv.4} parent=19 // pred_check_branch
        %186 = sbr.rel (%p184) target = $region24
      $region23: #{double_conv.4} parent=19 // pred_region
        %s187 = smul.u32 8, %s19
        %p188 = scmp.lt.s32.totalorder %s18, 1
        %s189 = scalar_select %p188, %s18, 1
        %p190 = scmp.lt.s32.totalorder %s187, 23
        %s191 = scalar_select %p190, %s187, 23
        %s192 = smul.addr %s191, 3
        %s193 = smul.addr %s189, 72
        %s194 = sadd.s32 %s192, %s193
        %s195 = smul.addr %s194, 8
        %s196 = scalar_lea.vmem %s0, %s195
        %s197 = smul.u32 8, %s19
      $region24: #{double_conv.4} parent=19 // pred_fallthru
        _
      // Predicated region
      $region25: #{double_conv.4} parent=19 // pred_check
        %p198 = pneg %p75
      $region26: #{double_conv.4} parent=19 // pred_check_branch
        %200 = sbr.rel (%p198) target = $region28
      $region27: #{double_conv.4} parent=19 // pred_region
        %s201 = sadd.s32 %s19, 1
        %s202 = smul.u32 8, %s201
        %p203 = scmp.lt.s32.totalorder %s18, 1
        %s204 = scalar_select %p203, %s18, 1
        %p205 = scmp.lt.s32.totalorder %s202, 23
        %s206 = scalar_select %p205, %s202, 23
        %s207 = smul.addr %s206, 3
        %s208 = smul.addr %s204, 72
        %s209 = sadd.s32 %s207, %s208
        %s210 = smul.addr %s209, 8
        %s211 = scalar_lea.vmem %s1, %s210
        %s212 = sadd.s32 %s19, 1
        %s213 = smul.u32 8, %s212
      $region28: #{double_conv.4} parent=19 // pred_fallthru
        _
    $region20: #{double_conv.4} parent=5 // pred_fallthru
      _
    %p214 = scmp.le.s32.totalorder 1, %s11
    %p215 = scmp.lt.s32.totalorder %s11, 5
    %p216 = pnand %p214, %p215
    %p217 = pneg %p216
    // Predicated region
    $region29: #{double_conv.4} parent=5 // pred_check
      _
    $region30: #{double_conv.4} parent=5 // pred_check_branch
      %219 = sbr.rel (%p216) target = $region32
    $region31: #{double_conv.4} parent=5 // pred_region
      %s220 = ssub.s32 %s11, 1
      %s221 = smul.u32 8, %s21
      %p222 = scmp.lt.s32.totalorder %s20, 1
      %s223 = scalar_select %p222, %s20, 1
      %p224 = scmp.lt.s32.totalorder %s221, 23
      %s225 = scalar_select %p224, %s221, 23
      %s226 = smul.addr %s225, 3
      %s227 = smul.addr %s223, 72
      %s228 = sadd.s32 %s226, %s227
      %s229 = smul.addr %s228, 8
      %s230 = scalar_lea.vmem %s0, %s229
      %p231 = pneg %p51
      %p232 = pneg %p48
      %s233 = sadd.s32 %s21, 1
      %s234 = smul.u32 8, %s233
      %p235 = scmp.lt.s32.totalorder %s20, 1
      %s236 = scalar_select %p235, %s20, 1
      %p237 = scmp.lt.s32.totalorder %s234, 23
      %s238 = scalar_select %p237, %s234, 23
      %s239 = smul.addr %s238, 3
      %s240 = smul.addr %s236, 72
      %s241 = sadd.s32 %s239, %s240
      %s242 = smul.addr %s241, 8
      %s243 = scalar_lea.vmem %s1, %s242
      %p244 = pneg %p81
      %p245 = pneg %p78
      %p246 = pneg %p102
      %p247 = pneg %p99
      %p248 = pneg %p132
      %p249 = pneg %p129
      %s250 = smul.u32 %s20, 2
      %s251 = sadd.s32 %s250, %s21
      %s252 = smul.u32 16, %s251
      %p253 = scmp.lt.s32.totalorder %s252, 63
      %s254 = scalar_select %p253, %s252, 63
      %s255 = smul.addr %s254, 8
      %s256 = scalar_lea.vmem %s3, %s255
      %p257 = pneg %p162
      %p258 = pneg %p159
      %s259 = smul.u32 %s20, 2
      %s260 = sadd.s32 %s259, %s21
      %p261 = scmp.lt.s32.totalorder %s260, 3
      %s262 = scalar_select %p261, %s260, 3
      %s263 = smul.addr %s262, 2
      %s264 = scalar_lea.vmem %s4, %s263
      %s265 = smul.u32 8, %s21
      %p266 = scmp.lt.s32.totalorder %s20, 1
      %s267 = scalar_select %p266, %s20, 1
      %p268 = scmp.lt.s32.totalorder %s265, 23
      %s269 = scalar_select %p268, %s265, 23
      %s270 = smul.addr %s269, 3
      %s271 = smul.addr %s267, 72
      %s272 = sadd.s32 %s270, %s271
      %s273 = smul.addr %s272, 8
      %s274 = scalar_lea.vmem %s0, %s273
      %s275 = smul.u32 8, %s21
      %s276 = sadd.s32 %s21, 1
      %s277 = smul.u32 8, %s276
      %p278 = scmp.lt.s32.totalorder %s20, 1
      %s279 = scalar_select %p278, %s20, 1
      %p280 = scmp.lt.s32.totalorder %s277, 23
      %s281 = scalar_select %p280, %s277, 23
      %s282 = smul.addr %s281, 3
      %s283 = smul.addr %s279, 72
      %s284 = sadd.s32 %s282, %s283
      %s285 = smul.addr %s284, 8
      %s286 = scalar_lea.vmem %s1, %s285
      %s287 = sadd.s32 %s21, 1
      %s288 = smul.u32 8, %s287
      %s289 = smul.u32 %s20, 2
      %s290 = sadd.s32 %s289, %s21
      %s291 = smul.u32 16, %s290
      %p292 = scmp.lt.s32.totalorder %s291, 63
      %s293 = scalar_select %p292, %s291, 63
      %s294 = smul.addr %s293, 8
      %s295 = scalar_lea.vmem %s3, %s294
      %s296 = smul.u32 %s20, 2
      %s297 = sadd.s32 %s296, %s21
      %s298 = smul.u32 16, %s297
      %s299 = smul.u32 %s20, 2
      %s300 = sadd.s32 %s299, %s21
      %p301 = scmp.lt.s32.totalorder %s300, 3
      %s302 = scalar_select %p301, %s300, 3
      %s303 = smul.addr %s302, 2
      %s304 = scalar_lea.vmem %s4, %s303
      %s305 = smul.u32 %s20, 2
      %s306 = sadd.s32 %s305, %s21
      %v307 = vld [vmem:[%s274] sm:$0xff]
      %v308 = vld [vmem:[%s274 + $0x8] sm:$0xff]
      %v309 = vld [vmem:[%s274 + $0x10] sm:$0x3]
      %v310 = vld [vmem:[%s274 + $0x18] sm:$0xff]
      %v311 = vld [vmem:[%s274 + $0x20] sm:$0xff]
      %v312 = vld [vmem:[%s274 + $0x28] sm:$0x3]
      %v313 = vld [vmem:[%s274 + $0x30] sm:$0xff]
      %v314 = vld [vmem:[%s274 + $0x38] sm:$0xff]
      %v315 = vld [vmem:[%s274 + $0x40] sm:$0x3]
      %v316 = vld [vmem:[%s274 + $0x48] sm:$0xff]
      %v317 = vld [vmem:[%s274 + $0x50] sm:$0xff]
      %v318 = vld [vmem:[%s274 + $0x58] sm:$0x3]
      %v319 = vld [vmem:[%s274 + $0x60] sm:$0xff]
      %v320 = vld [vmem:[%s274 + $0x68] sm:$0xff]
      %v321 = vld [vmem:[%s274 + $0x70] sm:$0x3]
      %v322 = vld [vmem:[%s274 + $0x78] sm:$0xff]
      %v323 = vld [vmem:[%s274 + $0x80] sm:$0xff]
      %v324 = vld [vmem:[%s274 + $0x88] sm:$0x3]
      %v325 = vld [vmem:[%s274 + $0x90] sm:$0xff]
      %v326 = vld [vmem:[%s274 + $0x98] sm:$0xff]
      %v327 = vld [vmem:[%s274 + $0xa0] sm:$0x3]
      %v328 = vld [vmem:[%s274 + $0xa8] sm:$0xff]
      %v329 = vld [vmem:[%s274 + $0xb0] sm:$0xff]
      %v330 = vld [vmem:[%s274 + $0xb8] sm:$0x3]
      %v331 = vld [vmem:[%s286] sm:$0xff]
      %v332 = vld [vmem:[%s286 + $0x8] sm:$0xff]
      %v333 = vld [vmem:[%s286 + $0x10] sm:$0x3]
      %v334 = vld [vmem:[%s286 + $0x18] sm:$0xff]
      %v335 = vld [vmem:[%s286 + $0x20] sm:$0xff]
      %v336 = vld [vmem:[%s286 + $0x28] sm:$0x3]
      %v337 = vld [vmem:[%s2] sm:$0xff]
      %v338 = vld [vmem:[%s2 + $0x8] sm:$0xff]
      %v339 = vld [vmem:[%s2 + $0x10] sm:$0xff]
      %v340 = vld [vmem:[%s2 + $0x18] sm:$0xff]
      %v341 = vld [vmem:[%s2 + $0x20] sm:$0xff]
      %v342 = vld [vmem:[%s2 + $0x28] sm:$0xff]
      %v343 = vld [vmem:[%s2 + $0x30] sm:$0xff]
      %v344 = vld [vmem:[%s2 + $0x38] sm:$0xff]
      %v345 = vld [vmem:[%s2 + $0x40] sm:$0xff]
      %v346 = vld [vmem:[%s2 + $0x48] sm:$0xff]
      %v347 = vld [vmem:[%s2 + $0x50] sm:$0xff]
      %v348 = vld [vmem:[%s2 + $0x58] sm:$0xff]
      %v349 = vld [vmem:[%s2 + $0x60] sm:$0xff]
      %v350 = vld [vmem:[%s2 + $0x68] sm:$0xff]
      %v351 = vld [vmem:[%s2 + $0x70] sm:$0xff]
      %v352 = vld [vmem:[%s2 + $0x78] sm:$0xff]
      %vm377 = vcmask 1046528
      %v378 = vrot.slane %v307, 1
      %v379 = vrot.slane %v308, 1
      %v380 = vsel %vm377, %v378, %v379
      %v381 = vrot.slane %v309, 1
      %v382 = vsel %vm377, %v379, %v381
      %v383 = vrot.slane %v310, 1
      %v384 = vrot.slane %v311, 1
      %v385 = vsel %vm377, %v383, %v384
      %v386 = vrot.slane %v312, 1
      %v387 = vsel %vm377, %v384, %v386
      %v388 = vrot.slane %v313, 1
      %v389 = vrot.slane %v314, 1
      %v390 = vsel %vm377, %v388, %v389
      %v391 = vrot.slane %v315, 1
      %v392 = vsel %vm377, %v389, %v391
      %v393 = vrot.slane %v316, 1
      %v394 = vrot.slane %v317, 1
      %v395 = vsel %vm377, %v393, %v394
      %v396 = vrot.slane %v318, 1
      %v397 = vsel %vm377, %v394, %v396
      %v398 = vrot.slane %v319, 1
      %v399 = vrot.slane %v320, 1
      %v400 = vsel %vm377, %v398, %v399
      %v401 = vrot.slane %v321, 1
      %v402 = vsel %vm377, %v399, %v401
      %v403 = vrot.slane %v322, 1
      %v404 = vrot.slane %v323, 1
      %v405 = vsel %vm377, %v403, %v404
      %v406 = vrot.slane %v324, 1
      %v407 = vsel %vm377, %v404, %v406
      %v408 = vrot.slane %v325, 1
      %v409 = vrot.slane %v326, 1
      %v410 = vsel %vm377, %v408, %v409
      %v411 = vrot.slane %v327, 1
      %v412 = vsel %vm377, %v409, %v411
      %v413 = vrot.slane %v328, 1
      %v414 = vrot.slane %v329, 1
      %v415 = vsel %vm377, %v413, %v414
      %v416 = vrot.slane %v330, 1
      %v417 = vsel %vm377, %v414, %v416
      %s434 = scalar_lea.vmem %s2, 128
      %v435 = vld [vmem:[%s434] sm:$0xff]
      %v436 = vld [vmem:[%s434 + $0x8] sm:$0xff]
      %v437 = vld [vmem:[%s434 + $0x10] sm:$0xff]
      %v438 = vld [vmem:[%s434 + $0x18] sm:$0xff]
      %v439 = vld [vmem:[%s434 + $0x20] sm:$0xff]
      %v440 = vld [vmem:[%s434 + $0x28] sm:$0xff]
      %v441 = vld [vmem:[%s434 + $0x30] sm:$0xff]
      %v442 = vld [vmem:[%s434 + $0x38] sm:$0xff]
      %v443 = vld [vmem:[%s434 + $0x40] sm:$0xff]
      %v444 = vld [vmem:[%s434 + $0x48] sm:$0xff]
      %v445 = vld [vmem:[%s434 + $0x50] sm:$0xff]
      %v446 = vld [vmem:[%s434 + $0x58] sm:$0xff]
      %v447 = vld [vmem:[%s434 + $0x60] sm:$0xff]
      %v448 = vld [vmem:[%s434 + $0x68] sm:$0xff]
      %v449 = vld [vmem:[%s434 + $0x70] sm:$0xff]
      %v450 = vld [vmem:[%s434 + $0x78] sm:$0xff]
      %451 = vmatprep.subr.mxu0 0.0
      %452 = vmatpush1.msra.mxu0 %v435
      %453 = vmatprep.subr.mxu0 0.0
      %454 = vmatpush1.msra.mxu0 %v436
      %455 = vmatprep.subr.mxu0 0.0
      %456 = vmatpush1.msra.mxu0 %v437
      %457 = vmatprep.subr.mxu0 0.0
      %458 = vmatpush1.msra.mxu0 %v438
      %459 = vmatprep.subr.mxu0 0.0
      %460 = vmatpush1.msra.mxu0 %v439
      %461 = vmatprep.subr.mxu0 0.0
      %462 = vmatpush1.msra.mxu0 %v440
      %463 = vmatprep.subr.mxu0 0.0
      %464 = vmatpush1.msra.mxu0 %v441
      %465 = vmatprep.subr.mxu0 0.0
      %466 = vmatpush1.msra.mxu0 %v442
      %467 = vmatprep.subr.mxu0 0.0
      %468 = vmatpush1.msra.mxu0 %v443
      %469 = vmatprep.subr.mxu0 0.0
      %470 = vmatpush1.msra.mxu0 %v444
      %471 = vmatprep.subr.mxu0 0.0
      %472 = vmatpush1.msra.mxu0 %v445
      %473 = vmatprep.subr.mxu0 0.0
      %474 = vmatpush1.msra.mxu0 %v446
      %475 = vmatprep.subr.mxu0 0.0
      %476 = vmatpush1.msra.mxu0 %v447
      %477 = vmatprep.subr.mxu0 0.0
      %478 = vmatpush1.msra.mxu0 %v448
      %479 = vmatprep.subr.mxu0 0.0
      %480 = vmatpush1.msra.mxu0 %v449
      %481 = vmatprep.subr.mxu0 0.0
      %482 = vmatpush1.msra.mxu0 %v450
      %483 = vmatprep.subr.mxu0 0.0
      %484 = vmatpush1.msra.mxu0 0.0
      %485 = vmatprep.subr.mxu0 0.0
      %486 = vmatpush1.msra.mxu0 0.0
      %487 = vmatprep.subr.mxu0 0.0
      %488 = vmatpush1.msra.mxu0 0.0
      %489 = vmatprep.subr.mxu0 0.0
      %490 = vmatpush1.msra.mxu0 0.0
      %491 = vmatprep.subr.mxu0 0.0
      %492 = vmatpush1.msra.mxu0 0.0
      %493 = vmatprep.subr.mxu0 0.0
      %494 = vmatpush1.msra.mxu0 0.0
      %495 = vmatprep.subr.mxu0 0.0
      %496 = vmatpush1.msra.mxu0 0.0
      %497 = vmatprep.subr.mxu0 0.0
      %498 = vmatpush1.msra.mxu0 0.0
      %499 = vmatprep.subr.mxu0 0.0
      %500 = vmatpush1.msra.mxu0 0.0
      %501 = vmatprep.subr.mxu0 0.0
      %502 = vmatpush1.msra.mxu0 0.0
      %503 = vmatprep.subr.mxu0 0.0
      %504 = vmatpush1.msra.mxu0 0.0
      %505 = vmatprep.subr.mxu0 0.0
      %506 = vmatpush1.msra.mxu0 0.0
      %507 = vmatprep.subr.mxu0 0.0
      %508 = vmatpush1.msra.mxu0 0.0
      %509 = vmatprep.subr.mxu0 0.0
      %510 = vmatpush1.msra.mxu0 0.0
      %511 = vmatprep.subr.mxu0 0.0
      %512 = vmatpush1.msra.mxu0 0.0
      %513 = vmatprep.subr.mxu0 0.0
      %514 = vmatpush1.msra.mxu0 0.0
      %515 = vmatprep.mubr.f32.mxu0 0.0
      %516 = vmatmul.mubr.f32.gmra.mrb[0].mxu0 %v380
      %v517 = vpop.f32.mrb[0].mxu0
      %v518 = vadd.f32 0.0, %v517
      %v519 = vpop.f32.mrb[0].mxu0
      %520 = vmatprep.mubr.f32.mxu0 0.0
      %521 = vmatmul.mubr.f32.gmra.mrb[0].mxu0 %v382
      %v522 = vpop.f32.mrb[0].mxu0
      %v523 = vadd.f32 0.0, %v522
      %v524 = vpop.f32.mrb[0].mxu0
      %525 = vmatprep.mubr.f32.mxu0 0.0
      %526 = vmatmul.mubr.f32.gmra.mrb[0].mxu0 %v385
      %v527 = vpop.f32.mrb[0].mxu0
      %v528 = vadd.f32 0.0, %v527
      %v529 = vpop.f32.mrb[0].mxu0
      %530 = vmatprep.mubr.f32.mxu0 0.0
      %531 = vmatmul.mubr.f32.gmra.mrb[0].mxu0 %v387
      %v532 = vpop.f32.mrb[0].mxu0
      %v533 = vadd.f32 0.0, %v532
      %v534 = vpop.f32.mrb[0].mxu0
      %535 = vmatprep.mubr.f32.mxu0 0.0
      %536 = vmatmul.mubr.f32.gmra.mrb[0].mxu0 %v390
      %v537 = vpop.f32.mrb[0].mxu0
      %v538 = vadd.f32 0.0, %v537
      %v539 = vpop.f32.mrb[0].mxu0
      %540 = vmatprep.mubr.f32.mxu0 0.0
      %541 = vmatmul.mubr.f32.gmra.mrb[0].mxu0 %v392
      %v542 = vpop.f32.mrb[0].mxu0
      %v543 = vadd.f32 0.0, %v542
      %v544 = vpop.f32.mrb[0].mxu0
      %545 = vmatprep.mubr.f32.mxu0 0.0
      %546 = vmatmul.mubr.f32.gmra.mrb[0].mxu0 %v395
      %v547 = vpop.f32.mrb[0].mxu0
      %v548 = vadd.f32 0.0, %v547
      %v549 = vpop.f32.mrb[0].mxu0
      %550 = vmatprep.mubr.f32.mxu0 0.0
      %551 = vmatmul.mubr.f32.gmra.mrb[0].mxu0 %v397
      %v552 = vpop.f32.mrb[0].mxu0
      %v553 = vadd.f32 0.0, %v552
      %v554 = vpop.f32.mrb[0].mxu0
      %555 = vmatprep.mubr.f32.mxu0 0.0
      %556 = vmatmul.mubr.f32.gmra.mrb[0].mxu0 %v400
      %v557 = vpop.f32.mrb[0].mxu0
      %v558 = vadd.f32 0.0, %v557
      %v559 = vpop.f32.mrb[0].mxu0
      %560 = vmatprep.mubr.f32.mxu0 0.0
      %561 = vmatmul.mubr.f32.gmra.mrb[0].mxu0 %v402
      %v562 = vpop.f32.mrb[0].mxu0
      %v563 = vadd.f32 0.0, %v562
      %v564 = vpop.f32.mrb[0].mxu0
      %565 = vmatprep.mubr.f32.mxu0 0.0
      %566 = vmatmul.mubr.f32.gmra.mrb[0].mxu0 %v405
      %v567 = vpop.f32.mrb[0].mxu0
      %v568 = vadd.f32 0.0, %v567
      %v569 = vpop.f32.mrb[0].mxu0
      %570 = vmatprep.mubr.f32.mxu0 0.0
      %571 = vmatmul.mubr.f32.gmra.mrb[0].mxu0 %v407
      %v572 = vpop.f32.mrb[0].mxu0
      %v573 = vadd.f32 0.0, %v572
      %v574 = vpop.f32.mrb[0].mxu0
      %575 = vmatprep.mubr.f32.mxu0 0.0
      %576 = vmatmul.mubr.f32.gmra.mrb[0].mxu0 %v410
      %v577 = vpop.f32.mrb[0].mxu0
      %v578 = vadd.f32 0.0, %v577
      %v579 = vpop.f32.mrb[0].mxu0
      %580 = vmatprep.mubr.f32.mxu0 0.0
      %581 = vmatmul.mubr.f32.gmra.mrb[0].mxu0 %v412
      %v582 = vpop.f32.mrb[0].mxu0
      %v583 = vadd.f32 0.0, %v582
      %v584 = vpop.f32.mrb[0].mxu0
      %585 = vmatprep.mubr.f32.mxu0 0.0
      %586 = vmatmul.mubr.f32.gmra.mrb[0].mxu0 %v415
      %v587 = vpop.f32.mrb[0].mxu0
      %v588 = vadd.f32 0.0, %v587
      %v589 = vpop.f32.mrb[0].mxu0
      %590 = vmatprep.mubr.f32.mxu0 0.0
      %591 = vmatmul.mubr.f32.gmra.mrb[0].mxu0 %v417
      %v592 = vpop.f32.mrb[0].mxu0
      %v593 = vadd.f32 0.0, %v592
      %v594 = vpop.f32.mrb[0].mxu0
      %595 = vdwg.mxu0
      %596 = vmatprep.subr.mxu0 0.0
      %597 = vmatpush1.msra.mxu0 %v337
      %598 = vmatprep.subr.mxu0 0.0
      %599 = vmatpush1.msra.mxu0 %v338
      %600 = vmatprep.subr.mxu0 0.0
      %601 = vmatpush1.msra.mxu0 %v339
      %602 = vmatprep.subr.mxu0 0.0
      %603 = vmatpush1.msra.mxu0 %v340
      %604 = vmatprep.subr.mxu0 0.0
      %605 = vmatpush1.msra.mxu0 %v341
      %606 = vmatprep.subr.mxu0 0.0
      %607 = vmatpush1.msra.mxu0 %v342
      %608 = vmatprep.subr.mxu0 0.0
      %609 = vmatpush1.msra.mxu0 %v343
      %610 = vmatprep.subr.mxu0 0.0
      %611 = vmatpush1.msra.mxu0 %v344
      %612 = vmatprep.subr.mxu0 0.0
      %613 = vmatpush1.msra.mxu0 %v345
      %614 = vmatprep.subr.mxu0 0.0
      %615 = vmatpush1.msra.mxu0 %v346
      %616 = vmatprep.subr.mxu0 0.0
      %617 = vmatpush1.msra.mxu0 %v347
      %618 = vmatprep.subr.mxu0 0.0
      %619 = vmatpush1.msra.mxu0 %v348
      %620 = vmatprep.subr.mxu0 0.0
      %621 = vmatpush1.msra.mxu0 %v349
      %622 = vmatprep.subr.mxu0 0.0
      %623 = vmatpush1.msra.mxu0 %v350
      %624 = vmatprep.subr.mxu0 0.0
      %625 = vmatpush1.msra.mxu0 %v351
      %626 = vmatprep.subr.mxu0 0.0
      %627 = vmatpush1.msra.mxu0 %v352
      %628 = vmatprep.subr.mxu0 0.0
      %629 = vmatpush1.msra.mxu0 0.0
      %630 = vmatprep.subr.mxu0 0.0
      %631 = vmatpush1.msra.mxu0 0.0
      %632 = vmatprep.subr.mxu0 0.0
      %633 = vmatpush1.msra.mxu0 0.0
      %634 = vmatprep.subr.mxu0 0.0
      %635 = vmatpush1.msra.mxu0 0.0
      %636 = vmatprep.subr.mxu0 0.0
      %637 = vmatpush1.msra.mxu0 0.0
      %638 = vmatprep.subr.mxu0 0.0
      %639 = vmatpush1.msra.mxu0 0.0
      %640 = vmatprep.subr.mxu0 0.0
      %641 = vmatpush1.msra.mxu0 0.0
      %642 = vmatprep.subr.mxu0 0.0
      %643 = vmatpush1.msra.mxu0 0.0
      %644 = vmatprep.subr.mxu0 0.0
      %645 = vmatpush1.msra.mxu0 0.0
      %646 = vmatprep.subr.mxu0 0.0
      %647 = vmatpush1.msra.mxu0 0.0
      %648 = vmatprep.subr.mxu0 0.0
      %649 = vmatpush1.msra.mxu0 0.0
      %650 = vmatprep.subr.mxu0 0.0
      %651 = vmatpush1.msra.mxu0 0.0
      %652 = vmatprep.subr.mxu0 0.0
      %653 = vmatpush1.msra.mxu0 0.0
      %654 = vmatprep.subr.mxu0 0.0
      %655 = vmatpush1.msra.mxu0 0.0
      %656 = vmatprep.subr.mxu0 0.0
      %657 = vmatpush1.msra.mxu0 0.0
      %658 = vmatprep.subr.mxu0 0.0
      %659 = vmatpush1.msra.mxu0 0.0
      %660 = vmatprep.mubr.f32.mxu0 0.0
      %661 = vmatmul.mubr.f32.gmra.mrb[0].mxu0 %v307
      %v662 = vpop.f32.mrb[0].mxu0
      %v663 = vadd.f32 %v518, %v662
      %v664 = vpop.f32.mrb[0].mxu0
      %665 = vmatprep.mubr.f32.mxu0 0.0
      %666 = vmatmul.mubr.f32.gmra.mrb[0].mxu0 %v308
      %v667 = vpop.f32.mrb[0].mxu0
      %v668 = vadd.f32 %v523, %v667
      %v669 = vpop.f32.mrb[0].mxu0
      %670 = vmatprep.mubr.f32.mxu0 0.0
      %671 = vmatmul.mubr.f32.gmra.mrb[0].mxu0 %v310
      %v672 = vpop.f32.mrb[0].mxu0
      %v673 = vadd.f32 %v528, %v672
      %v674 = vpop.f32.mrb[0].mxu0
      %675 = vmatprep.mubr.f32.mxu0 0.0
      %676 = vmatmul.mubr.f32.gmra.mrb[0].mxu0 %v311
      %v677 = vpop.f32.mrb[0].mxu0
      %v678 = vadd.f32 %v533, %v677
      %v679 = vpop.f32.mrb[0].mxu0
      %680 = vmatprep.mubr.f32.mxu0 0.0
      %681 = vmatmul.mubr.f32.gmra.mrb[0].mxu0 %v313
      %v682 = vpop.f32.mrb[0].mxu0
      %v683 = vadd.f32 %v538, %v682
      %v684 = vpop.f32.mrb[0].mxu0
      %685 = vmatprep.mubr.f32.mxu0 0.0
      %686 = vmatmul.mubr.f32.gmra.mrb[0].mxu0 %v314
      %v687 = vpop.f32.mrb[0].mxu0
      %v688 = vadd.f32 %v543, %v687
      %v689 = vpop.f32.mrb[0].mxu0
      %690 = vmatprep.mubr.f32.mxu0 0.0
      %691 = vmatmul.mubr.f32.gmra.mrb[0].mxu0 %v316
      %v692 = vpop.f32.mrb[0].mxu0
      %v693 = vadd.f32 %v548, %v692
      %v694 = vpop.f32.mrb[0].mxu0
      %695 = vmatprep.mubr.f32.mxu0 0.0
      %696 = vmatmul.mubr.f32.gmra.mrb[0].mxu0 %v317
      %v697 = vpop.f32.mrb[0].mxu0
      %v698 = vadd.f32 %v553, %v697
      %v699 = vpop.f32.mrb[0].mxu0
      %700 = vmatprep.mubr.f32.mxu0 0.0
      %701 = vmatmul.mubr.f32.gmra.mrb[0].mxu0 %v319
      %v702 = vpop.f32.mrb[0].mxu0
      %v703 = vadd.f32 %v558, %v702
      %v704 = vpop.f32.mrb[0].mxu0
      %705 = vmatprep.mubr.f32.mxu0 0.0
      %706 = vmatmul.mubr.f32.gmra.mrb[0].mxu0 %v320
      %v707 = vpop.f32.mrb[0].mxu0
      %v708 = vadd.f32 %v563, %v707
      %v709 = vpop.f32.mrb[0].mxu0
      %710 = vmatprep.mubr.f32.mxu0 0.0
      %711 = vmatmul.mubr.f32.gmra.mrb[0].mxu0 %v322
      %v712 = vpop.f32.mrb[0].mxu0
      %v713 = vadd.f32 %v568, %v712
      %v714 = vpop.f32.mrb[0].mxu0
      %715 = vmatprep.mubr.f32.mxu0 0.0
      %716 = vmatmul.mubr.f32.gmra.mrb[0].mxu0 %v323
      %v717 = vpop.f32.mrb[0].mxu0
      %v718 = vadd.f32 %v573, %v717
      %v719 = vpop.f32.mrb[0].mxu0
      %720 = vmatprep.mubr.f32.mxu0 0.0
      %721 = vmatmul.mubr.f32.gmra.mrb[0].mxu0 %v325
      %v722 = vpop.f32.mrb[0].mxu0
      %v723 = vadd.f32 %v578, %v722
      %v724 = vpop.f32.mrb[0].mxu0
      %725 = vmatprep.mubr.f32.mxu0 0.0
      %726 = vmatmul.mubr.f32.gmra.mrb[0].mxu0 %v326
      %v727 = vpop.f32.mrb[0].mxu0
      %v728 = vadd.f32 %v583, %v727
      %v729 = vpop.f32.mrb[0].mxu0
      %730 = vmatprep.mubr.f32.mxu0 0.0
      %731 = vmatmul.mubr.f32.gmra.mrb[0].mxu0 %v328
      %v732 = vpop.f32.mrb[0].mxu0
      %v733 = vadd.f32 %v588, %v732
      %v734 = vpop.f32.mrb[0].mxu0
      %735 = vmatprep.mubr.f32.mxu0 0.0
      %736 = vmatmul.mubr.f32.gmra.mrb[0].mxu0 %v329
      %v737 = vpop.f32.mrb[0].mxu0
      %v738 = vadd.f32 %v593, %v737
      %v739 = vpop.f32.mrb[0].mxu0
      %740 = vdwg.mxu0
      %vm741 = vcmask 1045504
      %v742 = vrot.slane %v307, 2
      %v743 = vrot.slane %v308, 2
      %v744 = vsel %vm741, %v742, %v743
      %v745 = vrot.slane %v309, 2
      %v746 = vsel %vm741, %v743, %v745
      %v747 = vrot.slane %v310, 2
      %v748 = vrot.slane %v311, 2
      %v749 = vsel %vm741, %v747, %v748
      %v750 = vrot.slane %v312, 2
      %v751 = vsel %vm741, %v748, %v750
      %v752 = vrot.slane %v313, 2
      %v753 = vrot.slane %v314, 2
      %v754 = vsel %vm741, %v752, %v753
      %v755 = vrot.slane %v315, 2
      %v756 = vsel %vm741, %v753, %v755
      %v757 = vrot.slane %v316, 2
      %v758 = vrot.slane %v317, 2
      %v759 = vsel %vm741, %v757, %v758
      %v760 = vrot.slane %v318, 2
      %v761 = vsel %vm741, %v758, %v760
      %v762 = vrot.slane %v319, 2
      %v763 = vrot.slane %v320, 2
      %v764 = vsel %vm741, %v762, %v763
      %v765 = vrot.slane %v321, 2
      %v766 = vsel %vm741, %v763, %v765
      %v767 = vrot.slane %v322, 2
      %v768 = vrot.slane %v323, 2
      %v769 = vsel %vm741, %v767, %v768
      %v770 = vrot.slane %v324, 2
      %v771 = vsel %vm741, %v768, %v770
      %v772 = vrot.slane %v325, 2
      %v773 = vrot.slane %v326, 2
      %v774 = vsel %vm741, %v772, %v773
      %v775 = vrot.slane %v327, 2
      %v776 = vsel %vm741, %v773, %v775
      %v777 = vrot.slane %v328, 2
      %v778 = vrot.slane %v329, 2
      %v779 = vsel %vm741, %v777, %v778
      %v780 = vrot.slane %v330, 2
      %v781 = vsel %vm741, %v778, %v780
      %s798 = scalar_lea.vmem %s2, 256
      %v799 = vld [vmem:[%s798] sm:$0xff]
      %v800 = vld [vmem:[%s798 + $0x8] sm:$0xff]
      %v801 = vld [vmem:[%s798 + $0x10] sm:$0xff]
      %v802 = vld [vmem:[%s798 + $0x18] sm:$0xff]
      %v803 = vld [vmem:[%s798 + $0x20] sm:$0xff]
      %v804 = vld [vmem:[%s798 + $0x28] sm:$0xff]
      %v805 = vld [vmem:[%s798 + $0x30] sm:$0xff]
      %v806 = vld [vmem:[%s798 + $0x38] sm:$0xff]
      %v807 = vld [vmem:[%s798 + $0x40] sm:$0xff]
      %v808 = vld [vmem:[%s798 + $0x48] sm:$0xff]
      %v809 = vld [vmem:[%s798 + $0x50] sm:$0xff]
      %v810 = vld [vmem:[%s798 + $0x58] sm:$0xff]
      %v811 = vld [vmem:[%s798 + $0x60] sm:$0xff]
      %v812 = vld [vmem:[%s798 + $0x68] sm:$0xff]
      %v813 = vld [vmem:[%s798 + $0x70] sm:$0xff]
      %v814 = vld [vmem:[%s798 + $0x78] sm:$0xff]
      %815 = vmatprep.subr.mxu0 0.0
      %816 = vmatpush1.msra.mxu0 %v799
      %817 = vmatprep.subr.mxu0 0.0
      %818 = vmatpush1.msra.mxu0 %v800
      %819 = vmatprep.subr.mxu0 0.0
      %820 = vmatpush1.msra.mxu0 %v801
      %821 = vmatprep.subr.mxu0 0.0
      %822 = vmatpush1.msra.mxu0 %v802
      %823 = vmatprep.subr.mxu0 0.0
      %824 = vmatpush1.msra.mxu0 %v803
      %825 = vmatprep.subr.mxu0 0.0
      %826 = vmatpush1.msra.mxu0 %v804
      %827 = vmatprep.subr.mxu0 0.0
      %828 = vmatpush1.msra.mxu0 %v805
      %829 = vmatprep.subr.mxu0 0.0
      %830 = vmatpush1.msra.mxu0 %v806
      %831 = vmatprep.subr.mxu0 0.0
      %832 = vmatpush1.msra.mxu0 %v807
      %833 = vmatprep.subr.mxu0 0.0
      %834 = vmatpush1.msra.mxu0 %v808
      %835 = vmatprep.subr.mxu0 0.0
      %836 = vmatpush1.msra.mxu0 %v809
      %837 = vmatprep.subr.mxu0 0.0
      %838 = vmatpush1.msra.mxu0 %v810
      %839 = vmatprep.subr.mxu0 0.0
      %840 = vmatpush1.msra.mxu0 %v811
      %841 = vmatprep.subr.mxu0 0.0
      %842 = vmatpush1.msra.mxu0 %v812
      %843 = vmatprep.subr.mxu0 0.0
      %844 = vmatpush1.msra.mxu0 %v813
      %845 = vmatprep.subr.mxu0 0.0
      %846 = vmatpush1.msra.mxu0 %v814
      %847 = vmatprep.subr.mxu0 0.0
      %848 = vmatpush1.msra.mxu0 0.0
      %849 = vmatprep.subr.mxu0 0.0
      %850 = vmatpush1.msra.mxu0 0.0
      %851 = vmatprep.subr.mxu0 0.0
      %852 = vmatpush1.msra.mxu0 0.0
      %853 = vmatprep.subr.mxu0 0.0
      %854 = vmatpush1.msra.mxu0 0.0
      %855 = vmatprep.subr.mxu0 0.0
      %856 = vmatpush1.msra.mxu0 0.0
      %857 = vmatprep.subr.mxu0 0.0
      %858 = vmatpush1.msra.mxu0 0.0
      %859 = vmatprep.subr.mxu0 0.0
      %860 = vmatpush1.msra.mxu0 0.0
      %861 = vmatprep.subr.mxu0 0.0
      %862 = vmatpush1.msra.mxu0 0.0
      %863 = vmatprep.subr.mxu0 0.0
      %864 = vmatpush1.msra.mxu0 0.0
      %865 = vmatprep.subr.mxu0 0.0
      %866 = vmatpush1.msra.mxu0 0.0
      %867 = vmatprep.subr.mxu0 0.0
      %868 = vmatpush1.msra.mxu0 0.0
      %869 = vmatprep.subr.mxu0 0.0
      %870 = vmatpush1.msra.mxu0 0.0
      %871 = vmatprep.subr.mxu0 0.0
      %872 = vmatpush1.msra.mxu0 0.0
      %873 = vmatprep.subr.mxu0 0.0
      %874 = vmatpush1.msra.mxu0 0.0
      %875 = vmatprep.subr.mxu0 0.0
      %876 = vmatpush1.msra.mxu0 0.0
      %877 = vmatprep.subr.mxu0 0.0
      %878 = vmatpush1.msra.mxu0 0.0
      %879 = vmatprep.mubr.f32.mxu0 0.0
      %880 = vmatmul.mubr.f32.gmra.mrb[0].mxu0 %v744
      %v881 = vpop.f32.mrb[0].mxu0
      %v882 = vadd.f32 0.0, %v881
      %v883 = vpop.f32.mrb[0].mxu0
      %884 = vmatprep.mubr.f32.mxu0 0.0
      %885 = vmatmul.mubr.f32.gmra.mrb[0].mxu0 %v746
      %v886 = vpop.f32.mrb[0].mxu0
      %v887 = vadd.f32 0.0, %v886
      %v888 = vpop.f32.mrb[0].mxu0
      %889 = vmatprep.mubr.f32.mxu0 0.0
      %890 = vmatmul.mubr.f32.gmra.mrb[0].mxu0 %v749
      %v891 = vpop.f32.mrb[0].mxu0
      %v892 = vadd.f32 0.0, %v891
      %v893 = vpop.f32.mrb[0].mxu0
      %894 = vmatprep.mubr.f32.mxu0 0.0
      %895 = vmatmul.mubr.f32.gmra.mrb[0].mxu0 %v751
      %v896 = vpop.f32.mrb[0].mxu0
      %v897 = vadd.f32 0.0, %v896
      %v898 = vpop.f32.mrb[0].mxu0
      %899 = vmatprep.mubr.f32.mxu0 0.0
      %900 = vmatmul.mubr.f32.gmra.mrb[0].mxu0 %v754
      %v901 = vpop.f32.mrb[0].mxu0
      %v902 = vadd.f32 0.0, %v901
      %v903 = vpop.f32.mrb[0].mxu0
      %904 = vmatprep.mubr.f32.mxu0 0.0
      %905 = vmatmul.mubr.f32.gmra.mrb[0].mxu0 %v756
      %v906 = vpop.f32.mrb[0].mxu0
      %v907 = vadd.f32 0.0, %v906
      %v908 = vpop.f32.mrb[0].mxu0
      %909 = vmatprep.mubr.f32.mxu0 0.0
      %910 = vmatmul.mubr.f32.gmra.mrb[0].mxu0 %v759
      %v911 = vpop.f32.mrb[0].mxu0
      %v912 = vadd.f32 0.0, %v911
      %v913 = vpop.f32.mrb[0].mxu0
      %914 = vmatprep.mubr.f32.mxu0 0.0
      %915 = vmatmul.mubr.f32.gmra.mrb[0].mxu0 %v761
      %v916 = vpop.f32.mrb[0].mxu0
      %v917 = vadd.f32 0.0, %v916
      %v918 = vpop.f32.mrb[0].mxu0
      %919 = vmatprep.mubr.f32.mxu0 0.0
      %920 = vmatmul.mubr.f32.gmra.mrb[0].mxu0 %v764
      %v921 = vpop.f32.mrb[0].mxu0
      %v922 = vadd.f32 0.0, %v921
      %v923 = vpop.f32.mrb[0].mxu0
      %924 = vmatprep.mubr.f32.mxu0 0.0
      %925 = vmatmul.mubr.f32.gmra.mrb[0].mxu0 %v766
      %v926 = vpop.f32.mrb[0].mxu0
      %v927 = vadd.f32 0.0, %v926
      %v928 = vpop.f32.mrb[0].mxu0
      %929 = vmatprep.mubr.f32.mxu0 0.0
      %930 = vmatmul.mubr.f32.gmra.mrb[0].mxu0 %v769
      %v931 = vpop.f32.mrb[0].mxu0
      %v932 = vadd.f32 0.0, %v931
      %v933 = vpop.f32.mrb[0].mxu0
      %934 = vmatprep.mubr.f32.mxu0 0.0
      %935 = vmatmul.mubr.f32.gmra.mrb[0].mxu0 %v771
      %v936 = vpop.f32.mrb[0].mxu0
      %v937 = vadd.f32 0.0, %v936
      %v938 = vpop.f32.mrb[0].mxu0
      %939 = vmatprep.mubr.f32.mxu0 0.0
      %940 = vmatmul.mubr.f32.gmra.mrb[0].mxu0 %v774
      %v941 = vpop.f32.mrb[0].mxu0
      %v942 = vadd.f32 0.0, %v941
      %v943 = vpop.f32.mrb[0].mxu0
      %944 = vmatprep.mubr.f32.mxu0 0.0
      %945 = vmatmul.mubr.f32.gmra.mrb[0].mxu0 %v776
      %v946 = vpop.f32.mrb[0].mxu0
      %v947 = vadd.f32 0.0, %v946
      %v948 = vpop.f32.mrb[0].mxu0
      %949 = vmatprep.mubr.f32.mxu0 0.0
      %950 = vmatmul.mubr.f32.gmra.mrb[0].mxu0 %v779
      %v951 = vpop.f32.mrb[0].mxu0
      %v952 = vadd.f32 0.0, %v951
      %v953 = vpop.f32.mrb[0].mxu0
      %954 = vmatprep.mubr.f32.mxu0 0.0
      %955 = vmatmul.mubr.f32.gmra.mrb[0].mxu0 %v781
      %v956 = vpop.f32.mrb[0].mxu0
      %v957 = vadd.f32 0.0, %v956
      %v958 = vpop.f32.mrb[0].mxu0
      %959 = vdwg.mxu0
      %v960 = vadd.f32 %v663, %v882
      %v961 = vadd.f32 %v668, %v887
      %v962 = vadd.f32 %v673, %v892
      %v963 = vadd.f32 %v678, %v897
      %v964 = vadd.f32 %v683, %v902
      %v965 = vadd.f32 %v688, %v907
      %v966 = vadd.f32 %v693, %v912
      %v967 = vadd.f32 %v698, %v917
      %v968 = vadd.f32 %v703, %v922
      %v969 = vadd.f32 %v708, %v927
      %v970 = vadd.f32 %v713, %v932
      %v971 = vadd.f32 %v718, %v937
      %v972 = vadd.f32 %v723, %v942
      %v973 = vadd.f32 %v728, %v947
      %v974 = vadd.f32 %v733, %v952
      %v975 = vadd.f32 %v738, %v957
      %s976 = scalar_lea.vmem %s2, 384
      %v977 = vld [vmem:[%s976] sm:$0xff]
      %v978 = vld [vmem:[%s976 + $0x8] sm:$0xff]
      %v979 = vld [vmem:[%s976 + $0x10] sm:$0xff]
      %v980 = vld [vmem:[%s976 + $0x18] sm:$0xff]
      %v981 = vld [vmem:[%s976 + $0x20] sm:$0xff]
      %v982 = vld [vmem:[%s976 + $0x28] sm:$0xff]
      %v983 = vld [vmem:[%s976 + $0x30] sm:$0xff]
      %v984 = vld [vmem:[%s976 + $0x38] sm:$0xff]
      %v985 = vld [vmem:[%s976 + $0x40] sm:$0xff]
      %v986 = vld [vmem:[%s976 + $0x48] sm:$0xff]
      %v987 = vld [vmem:[%s976 + $0x50] sm:$0xff]
      %v988 = vld [vmem:[%s976 + $0x58] sm:$0xff]
      %v989 = vld [vmem:[%s976 + $0x60] sm:$0xff]
      %v990 = vld [vmem:[%s976 + $0x68] sm:$0xff]
      %v991 = vld [vmem:[%s976 + $0x70] sm:$0xff]
      %v992 = vld [vmem:[%s976 + $0x78] sm:$0xff]
      %993 = vmatprep.subr.mxu0 0.0
      %994 = vmatpush1.msra.mxu0 %v977
      %995 = vmatprep.subr.mxu0 0.0
      %996 = vmatpush1.msra.mxu0 %v978
      %997 = vmatprep.subr.mxu0 0.0
      %998 = vmatpush1.msra.mxu0 %v979
      %999 = vmatprep.subr.mxu0 0.0
      %1000 = vmatpush1.msra.mxu0 %v980
      %1001 = vmatprep.subr.mxu0 0.0
      %1002 = vmatpush1.msra.mxu0 %v981
      %1003 = vmatprep.subr.mxu0 0.0
      %1004 = vmatpush1.msra.mxu0 %v982
      %1005 = vmatprep.subr.mxu0 0.0
      %1006 = vmatpush1.msra.mxu0 %v983
      %1007 = vmatprep.subr.mxu0 0.0
      %1008 = vmatpush1.msra.mxu0 %v984
      %1009 = vmatprep.subr.mxu0 0.0
      %1010 = vmatpush1.msra.mxu0 %v985
      %1011 = vmatprep.subr.mxu0 0.0
      %1012 = vmatpush1.msra.mxu0 %v986
      %1013 = vmatprep.subr.mxu0 0.0
      %1014 = vmatpush1.msra.mxu0 %v987
      %1015 = vmatprep.subr.mxu0 0.0
      %1016 = vmatpush1.msra.mxu0 %v988
      %1017 = vmatprep.subr.mxu0 0.0
      %1018 = vmatpush1.msra.mxu0 %v989
      %1019 = vmatprep.subr.mxu0 0.0
      %1020 = vmatpush1.msra.mxu0 %v990
      %1021 = vmatprep.subr.mxu0 0.0
      %1022 = vmatpush1.msra.mxu0 %v991
      %1023 = vmatprep.subr.mxu0 0.0
      %1024 = vmatpush1.msra.mxu0 %v992
      %1025 = vmatprep.subr.mxu0 0.0
      %1026 = vmatpush1.msra.mxu0 0.0
      %1027 = vmatprep.subr.mxu0 0.0
      %1028 = vmatpush1.msra.mxu0 0.0
      %1029 = vmatprep.subr.mxu0 0.0
      %1030 = vmatpush1.msra.mxu0 0.0
      %1031 = vmatprep.subr.mxu0 0.0
      %1032 = vmatpush1.msra.mxu0 0.0
      %1033 = vmatprep.subr.mxu0 0.0
      %1034 = vmatpush1.msra.mxu0 0.0
      %1035 = vmatprep.subr.mxu0 0.0
      %1036 = vmatpush1.msra.mxu0 0.0
      %1037 = vmatprep.subr.mxu0 0.0
      %1038 = vmatpush1.msra.mxu0 0.0
      %1039 = vmatprep.subr.mxu0 0.0
      %1040 = vmatpush1.msra.mxu0 0.0
      %1041 = vmatprep.subr.mxu0 0.0
      %1042 = vmatpush1.msra.mxu0 0.0
      %1043 = vmatprep.subr.mxu0 0.0
      %1044 = vmatpush1.msra.mxu0 0.0
      %1045 = vmatprep.subr.mxu0 0.0
      %1046 = vmatpush1.msra.mxu0 0.0
      %1047 = vmatprep.subr.mxu0 0.0
      %1048 = vmatpush1.msra.mxu0 0.0
      %1049 = vmatprep.subr.mxu0 0.0
      %1050 = vmatpush1.msra.mxu0 0.0
      %1051 = vmatprep.subr.mxu0 0.0
      %1052 = vmatpush1.msra.mxu0 0.0
      %1053 = vmatprep.subr.mxu0 0.0
      %1054 = vmatpush1.msra.mxu0 0.0
      %1055 = vmatprep.subr.mxu0 0.0
      %1056 = vmatpush1.msra.mxu0 0.0
      %1057 = vmatprep.mubr.f32.mxu0 0.0
      %1058 = vmatmul.mubr.f32.gmra.mrb[0].mxu0 %v310
      %v1059 = vpop.f32.mrb[0].mxu0
      %v1060 = vadd.f32 0.0, %v1059
      %v1061 = vpop.f32.mrb[0].mxu0
      %1062 = vmatprep.mubr.f32.mxu0 0.0
      %1063 = vmatmul.mubr.f32.gmra.mrb[0].mxu0 %v311
      %v1064 = vpop.f32.mrb[0].mxu0
      %v1065 = vadd.f32 0.0, %v1064
      %v1066 = vpop.f32.mrb[0].mxu0
      %1067 = vmatprep.mubr.f32.mxu0 0.0
      %1068 = vmatmul.mubr.f32.gmra.mrb[0].mxu0 %v313
      %v1069 = vpop.f32.mrb[0].mxu0
      %v1070 = vadd.f32 0.0, %v1069
      %v1071 = vpop.f32.mrb[0].mxu0
      %1072 = vmatprep.mubr.f32.mxu0 0.0
      %1073 = vmatmul.mubr.f32.gmra.mrb[0].mxu0 %v314
      %v1074 = vpop.f32.mrb[0].mxu0
      %v1075 = vadd.f32 0.0, %v1074
      %v1076 = vpop.f32.mrb[0].mxu0
      %1077 = vmatprep.mubr.f32.mxu0 0.0
      %1078 = vmatmul.mubr.f32.gmra.mrb[0].mxu0 %v316
      %v1079 = vpop.f32.mrb[0].mxu0
      %v1080 = vadd.f32 0.0, %v1079
      %v1081 = vpop.f32.mrb[0].mxu0
      %1082 = vmatprep.mubr.f32.mxu0 0.0
      %1083 = vmatmul.mubr.f32.gmra.mrb[0].mxu0 %v317
      %v1084 = vpop.f32.mrb[0].mxu0
      %v1085 = vadd.f32 0.0, %v1084
      %v1086 = vpop.f32.mrb[0].mxu0
      %1087 = vmatprep.mubr.f32.mxu0 0.0
      %1088 = vmatmul.mubr.f32.gmra.mrb[0].mxu0 %v319
      %v1089 = vpop.f32.mrb[0].mxu0
      %v1090 = vadd.f32 0.0, %v1089
      %v1091 = vpop.f32.mrb[0].mxu0
      %1092 = vmatprep.mubr.f32.mxu0 0.0
      %1093 = vmatmul.mubr.f32.gmra.mrb[0].mxu0 %v320
      %v1094 = vpop.f32.mrb[0].mxu0
      %v1095 = vadd.f32 0.0, %v1094
      %v1096 = vpop.f32.mrb[0].mxu0
      %1097 = vmatprep.mubr.f32.mxu0 0.0
      %1098 = vmatmul.mubr.f32.gmra.mrb[0].mxu0 %v322
      %v1099 = vpop.f32.mrb[0].mxu0
      %v1100 = vadd.f32 0.0, %v1099
      %v1101 = vpop.f32.mrb[0].mxu0
      %1102 = vmatprep.mubr.f32.mxu0 0.0
      %1103 = vmatmul.mubr.f32.gmra.mrb[0].mxu0 %v323
      %v1104 = vpop.f32.mrb[0].mxu0
      %v1105 = vadd.f32 0.0, %v1104
      %v1106 = vpop.f32.mrb[0].mxu0
      %1107 = vmatprep.mubr.f32.mxu0 0.0
      %1108 = vmatmul.mubr.f32.gmra.mrb[0].mxu0 %v325
      %v1109 = vpop.f32.mrb[0].mxu0
      %v1110 = vadd.f32 0.0, %v1109
      %v1111 = vpop.f32.mrb[0].mxu0
      %1112 = vmatprep.mubr.f32.mxu0 0.0
      %1113 = vmatmul.mubr.f32.gmra.mrb[0].mxu0 %v326
      %v1114 = vpop.f32.mrb[0].mxu0
      %v1115 = vadd.f32 0.0, %v1114
      %v1116 = vpop.f32.mrb[0].mxu0
      %1117 = vmatprep.mubr.f32.mxu0 0.0
      %1118 = vmatmul.mubr.f32.gmra.mrb[0].mxu0 %v328
      %v1119 = vpop.f32.mrb[0].mxu0
      %v1120 = vadd.f32 0.0, %v1119
      %v1121 = vpop.f32.mrb[0].mxu0
      %1122 = vmatprep.mubr.f32.mxu0 0.0
      %1123 = vmatmul.mubr.f32.gmra.mrb[0].mxu0 %v329
      %v1124 = vpop.f32.mrb[0].mxu0
      %v1125 = vadd.f32 0.0, %v1124
      %v1126 = vpop.f32.mrb[0].mxu0
      %1127 = vmatprep.mubr.f32.mxu0 0.0
      %1128 = vmatmul.mubr.f32.gmra.mrb[0].mxu0 %v331
      %v1129 = vpop.f32.mrb[0].mxu0
      %v1130 = vadd.f32 0.0, %v1129
      %v1131 = vpop.f32.mrb[0].mxu0
      %1132 = vmatprep.mubr.f32.mxu0 0.0
      %1133 = vmatmul.mubr.f32.gmra.mrb[0].mxu0 %v332
      %v1134 = vpop.f32.mrb[0].mxu0
      %v1135 = vadd.f32 0.0, %v1134
      %v1136 = vpop.f32.mrb[0].mxu0
      %1137 = vdwg.mxu0
      %v1138 = vadd.f32 %v960, %v1060
      %v1139 = vadd.f32 %v961, %v1065
      %v1140 = vadd.f32 %v962, %v1070
      %v1141 = vadd.f32 %v963, %v1075
      %v1142 = vadd.f32 %v964, %v1080
      %v1143 = vadd.f32 %v965, %v1085
      %v1144 = vadd.f32 %v966, %v1090
      %v1145 = vadd.f32 %v967, %v1095
      %v1146 = vadd.f32 %v968, %v1100
      %v1147 = vadd.f32 %v969, %v1105
      %v1148 = vadd.f32 %v970, %v1110
      %v1149 = vadd.f32 %v971, %v1115
      %v1150 = vadd.f32 %v972, %v1120
      %v1151 = vadd.f32 %v973, %v1125
      %v1152 = vadd.f32 %v974, %v1130
      %v1153 = vadd.f32 %v975, %v1135
      %v1157 = vrot.slane %v331, 1
      %v1158 = vrot.slane %v332, 1
      %v1159 = vsel %vm377, %v1157, %v1158
      %v1160 = vrot.slane %v333, 1
      %v1161 = vsel %vm377, %v1158, %v1160
      %s1164 = scalar_lea.vmem %s2, 512
      %v1165 = vld [vmem:[%s1164] sm:$0xff]
      %v1166 = vld [vmem:[%s1164 + $0x8] sm:$0xff]
      %v1167 = vld [vmem:[%s1164 + $0x10] sm:$0xff]
      %v1168 = vld [vmem:[%s1164 + $0x18] sm:$0xff]
      %v1169 = vld [vmem:[%s1164 + $0x20] sm:$0xff]
      %v1170 = vld [vmem:[%s1164 + $0x28] sm:$0xff]
      %v1171 = vld [vmem:[%s1164 + $0x30] sm:$0xff]
      %v1172 = vld [vmem:[%s1164 + $0x38] sm:$0xff]
      %v1173 = vld [vmem:[%s1164 + $0x40] sm:$0xff]
      %v1174 = vld [vmem:[%s1164 + $0x48] sm:$0xff]
      %v1175 = vld [vmem:[%s1164 + $0x50] sm:$0xff]
      %v1176 = vld [vmem:[%s1164 + $0x58] sm:$0xff]
      %v1177 = vld [vmem:[%s1164 + $0x60] sm:$0xff]
      %v1178 = vld [vmem:[%s1164 + $0x68] sm:$0xff]
      %v1179 = vld [vmem:[%s1164 + $0x70] sm:$0xff]
      %v1180 = vld [vmem:[%s1164 + $0x78] sm:$0xff]
      %1181 = vmatprep.subr.mxu0 0.0
      %1182 = vmatpush1.msra.mxu0 %v1165
      %1183 = vmatprep.subr.mxu0 0.0
      %1184 = vmatpush1.msra.mxu0 %v1166
      %1185 = vmatprep.subr.mxu0 0.0
      %1186 = vmatpush1.msra.mxu0 %v1167
      %1187 = vmatprep.subr.mxu0 0.0
      %1188 = vmatpush1.msra.mxu0 %v1168
      %1189 = vmatprep.subr.mxu0 0.0
      %1190 = vmatpush1.msra.mxu0 %v1169
      %1191 = vmatprep.subr.mxu0 0.0
      %1192 = vmatpush1.msra.mxu0 %v1170
      %1193 = vmatprep.subr.mxu0 0.0
      %1194 = vmatpush1.msra.mxu0 %v1171
      %1195 = vmatprep.subr.mxu0 0.0
      %1196 = vmatpush1.msra.mxu0 %v1172
      %1197 = vmatprep.subr.mxu0 0.0
      %1198 = vmatpush1.msra.mxu0 %v1173
      %1199 = vmatprep.subr.mxu0 0.0
      %1200 = vmatpush1.msra.mxu0 %v1174
      %1201 = vmatprep.subr.mxu0 0.0
      %1202 = vmatpush1.msra.mxu0 %v1175
      %1203 = vmatprep.subr.mxu0 0.0
      %1204 = vmatpush1.msra.mxu0 %v1176
      %1205 = vmatprep.subr.mxu0 0.0
      %1206 = vmatpush1.msra.mxu0 %v1177
      %1207 = vmatprep.subr.mxu0 0.0
      %1208 = vmatpush1.msra.mxu0 %v1178
      %1209 = vmatprep.subr.mxu0 0.0
      %1210 = vmatpush1.msra.mxu0 %v1179
      %1211 = vmatprep.subr.mxu0 0.0
      %1212 = vmatpush1.msra.mxu0 %v1180
      %1213 = vmatprep.subr.mxu0 0.0
      %1214 = vmatpush1.msra.mxu0 0.0
      %1215 = vmatprep.subr.mxu0 0.0
      %1216 = vmatpush1.msra.mxu0 0.0
      %1217 = vmatprep.subr.mxu0 0.0
      %1218 = vmatpush1.msra.mxu0 0.0
      %1219 = vmatprep.subr.mxu0 0.0
      %1220 = vmatpush1.msra.mxu0 0.0
      %1221 = vmatprep.subr.mxu0 0.0
      %1222 = vmatpush1.msra.mxu0 0.0
      %1223 = vmatprep.subr.mxu0 0.0
      %1224 = vmatpush1.msra.mxu0 0.0
      %1225 = vmatprep.subr.mxu0 0.0
      %1226 = vmatpush1.msra.mxu0 0.0
      %1227 = vmatprep.subr.mxu0 0.0
      %1228 = vmatpush1.msra.mxu0 0.0
      %1229 = vmatprep.subr.mxu0 0.0
      %1230 = vmatpush1.msra.mxu0 0.0
      %1231 = vmatprep.subr.mxu0 0.0
      %1232 = vmatpush1.msra.mxu0 0.0
      %1233 = vmatprep.subr.mxu0 0.0
      %1234 = vmatpush1.msra.mxu0 0.0
      %1235 = vmatprep.subr.mxu0 0.0
      %1236 = vmatpush1.msra.mxu0 0.0
      %1237 = vmatprep.subr.mxu0 0.0
      %1238 = vmatpush1.msra.mxu0 0.0
      %1239 = vmatprep.subr.mxu0 0.0
      %1240 = vmatpush1.msra.mxu0 0.0
      %1241 = vmatprep.subr.mxu0 0.0
      %1242 = vmatpush1.msra.mxu0 0.0
      %1243 = vmatprep.subr.mxu0 0.0
      %1244 = vmatpush1.msra.mxu0 0.0
      %1245 = vmatprep.mubr.f32.mxu0 0.0
      %1246 = vmatmul.mubr.f32.gmra.mrb[0].mxu0 %v385
      %v1247 = vpop.f32.mrb[0].mxu0
      %v1248 = vadd.f32 0.0, %v1247
      %v1249 = vpop.f32.mrb[0].mxu0
      %1250 = vmatprep.mubr.f32.mxu0 0.0
      %1251 = vmatmul.mubr.f32.gmra.mrb[0].mxu0 %v387
      %v1252 = vpop.f32.mrb[0].mxu0
      %v1253 = vadd.f32 0.0, %v1252
      %v1254 = vpop.f32.mrb[0].mxu0
      %1255 = vmatprep.mubr.f32.mxu0 0.0
      %1256 = vmatmul.mubr.f32.gmra.mrb[0].mxu0 %v390
      %v1257 = vpop.f32.mrb[0].mxu0
      %v1258 = vadd.f32 0.0, %v1257
      %v1259 = vpop.f32.mrb[0].mxu0
      %1260 = vmatprep.mubr.f32.mxu0 0.0
      %1261 = vmatmul.mubr.f32.gmra.mrb[0].mxu0 %v392
      %v1262 = vpop.f32.mrb[0].mxu0
      %v1263 = vadd.f32 0.0, %v1262
      %v1264 = vpop.f32.mrb[0].mxu0
      %1265 = vmatprep.mubr.f32.mxu0 0.0
      %1266 = vmatmul.mubr.f32.gmra.mrb[0].mxu0 %v395
      %v1267 = vpop.f32.mrb[0].mxu0
      %v1268 = vadd.f32 0.0, %v1267
      %v1269 = vpop.f32.mrb[0].mxu0
      %1270 = vmatprep.mubr.f32.mxu0 0.0
      %1271 = vmatmul.mubr.f32.gmra.mrb[0].mxu0 %v397
      %v1272 = vpop.f32.mrb[0].mxu0
      %v1273 = vadd.f32 0.0, %v1272
      %v1274 = vpop.f32.mrb[0].mxu0
      %1275 = vmatprep.mubr.f32.mxu0 0.0
      %1276 = vmatmul.mubr.f32.gmra.mrb[0].mxu0 %v400
      %v1277 = vpop.f32.mrb[0].mxu0
      %v1278 = vadd.f32 0.0, %v1277
      %v1279 = vpop.f32.mrb[0].mxu0
      %1280 = vmatprep.mubr.f32.mxu0 0.0
      %1281 = vmatmul.mubr.f32.gmra.mrb[0].mxu0 %v402
      %v1282 = vpop.f32.mrb[0].mxu0
      %v1283 = vadd.f32 0.0, %v1282
      %v1284 = vpop.f32.mrb[0].mxu0
      %1285 = vmatprep.mubr.f32.mxu0 0.0
      %1286 = vmatmul.mubr.f32.gmra.mrb[0].mxu0 %v405
      %v1287 = vpop.f32.mrb[0].mxu0
      %v1288 = vadd.f32 0.0, %v1287
      %v1289 = vpop.f32.mrb[0].mxu0
      %1290 = vmatprep.mubr.f32.mxu0 0.0
      %1291 = vmatmul.mubr.f32.gmra.mrb[0].mxu0 %v407
      %v1292 = vpop.f32.mrb[0].mxu0
      %v1293 = vadd.f32 0.0, %v1292
      %v1294 = vpop.f32.mrb[0].mxu0
      %1295 = vmatprep.mubr.f32.mxu0 0.0
      %1296 = vmatmul.mubr.f32.gmra.mrb[0].mxu0 %v410
      %v1297 = vpop.f32.mrb[0].mxu0
      %v1298 = vadd.f32 0.0, %v1297
      %v1299 = vpop.f32.mrb[0].mxu0
      %1300 = vmatprep.mubr.f32.mxu0 0.0
      %1301 = vmatmul.mubr.f32.gmra.mrb[0].mxu0 %v412
      %v1302 = vpop.f32.mrb[0].mxu0
      %v1303 = vadd.f32 0.0, %v1302
      %v1304 = vpop.f32.mrb[0].mxu0
      %1305 = vmatprep.mubr.f32.mxu0 0.0
      %1306 = vmatmul.mubr.f32.gmra.mrb[0].mxu0 %v415
      %v1307 = vpop.f32.mrb[0].mxu0
      %v1308 = vadd.f32 0.0, %v1307
      %v1309 = vpop.f32.mrb[0].mxu0
      %1310 = vmatprep.mubr.f32.mxu0 0.0
      %1311 = vmatmul.mubr.f32.gmra.mrb[0].mxu0 %v417
      %v1312 = vpop.f32.mrb[0].mxu0
      %v1313 = vadd.f32 0.0, %v1312
      %v1314 = vpop.f32.mrb[0].mxu0
      %1315 = vmatprep.mubr.f32.mxu0 0.0
      %1316 = vmatmul.mubr.f32.gmra.mrb[0].mxu0 %v1159
      %v1317 = vpop.f32.mrb[0].mxu0
      %v1318 = vadd.f32 0.0, %v1317
      %v1319 = vpop.f32.mrb[0].mxu0
      %1320 = vmatprep.mubr.f32.mxu0 0.0
      %1321 = vmatmul.mubr.f32.gmra.mrb[0].mxu0 %v1161
      %v1322 = vpop.f32.mrb[0].mxu0
      %v1323 = vadd.f32 0.0, %v1322
      %v1324 = vpop.f32.mrb[0].mxu0
      %1325 = vdwg.mxu0
      %v1326 = vadd.f32 %v1138, %v1248
      %v1327 = vadd.f32 %v1139, %v1253
      %v1328 = vadd.f32 %v1140, %v1258
      %v1329 = vadd.f32 %v1141, %v1263
      %v1330 = vadd.f32 %v1142, %v1268
      %v1331 = vadd.f32 %v1143, %v1273
      %v1332 = vadd.f32 %v1144, %v1278
      %v1333 = vadd.f32 %v1145, %v1283
      %v1334 = vadd.f32 %v1146, %v1288
      %v1335 = vadd.f32 %v1147, %v1293
      %v1336 = vadd.f32 %v1148, %v1298
      %v1337 = vadd.f32 %v1149, %v1303
      %v1338 = vadd.f32 %v1150, %v1308
      %v1339 = vadd.f32 %v1151, %v1313
      %v1340 = vadd.f32 %v1152, %v1318
      %v1341 = vadd.f32 %v1153, %v1323
      %v1342 = vrot.slane %v331, 2
      %v1343 = vrot.slane %v332, 2
      %v1344 = vsel %vm741, %v1342, %v1343
      %v1345 = vrot.slane %v333, 2
      %v1346 = vsel %vm741, %v1343, %v1345
      %s1349 = scalar_lea.vmem %s2, 640
      %v1350 = vld [vmem:[%s1349] sm:$0xff]
      %v1351 = vld [vmem:[%s1349 + $0x8] sm:$0xff]
      %v1352 = vld [vmem:[%s1349 + $0x10] sm:$0xff]
      %v1353 = vld [vmem:[%s1349 + $0x18] sm:$0xff]
      %v1354 = vld [vmem:[%s1349 + $0x20] sm:$0xff]
      %v1355 = vld [vmem:[%s1349 + $0x28] sm:$0xff]
      %v1356 = vld [vmem:[%s1349 + $0x30] sm:$0xff]
      %v1357 = vld [vmem:[%s1349 + $0x38] sm:$0xff]
      %v1358 = vld [vmem:[%s1349 + $0x40] sm:$0xff]
      %v1359 = vld [vmem:[%s1349 + $0x48] sm:$0xff]
      %v1360 = vld [vmem:[%s1349 + $0x50] sm:$0xff]
      %v1361 = vld [vmem:[%s1349 + $0x58] sm:$0xff]
      %v1362 = vld [vmem:[%s1349 + $0x60] sm:$0xff]
      %v1363 = vld [vmem:[%s1349 + $0x68] sm:$0xff]
      %v1364 = vld [vmem:[%s1349 + $0x70] sm:$0xff]
      %v1365 = vld [vmem:[%s1349 + $0x78] sm:$0xff]
      %1366 = vmatprep.subr.mxu0 0.0
      %1367 = vmatpush1.msra.mxu0 %v1350
      %1368 = vmatprep.subr.mxu0 0.0
      %1369 = vmatpush1.msra.mxu0 %v1351
      %1370 = vmatprep.subr.mxu0 0.0
      %1371 = vmatpush1.msra.mxu0 %v1352
      %1372 = vmatprep.subr.mxu0 0.0
      %1373 = vmatpush1.msra.mxu0 %v1353
      %1374 = vmatprep.subr.mxu0 0.0
      %1375 = vmatpush1.msra.mxu0 %v1354
      %1376 = vmatprep.subr.mxu0 0.0
      %1377 = vmatpush1.msra.mxu0 %v1355
      %1378 = vmatprep.subr.mxu0 0.0
      %1379 = vmatpush1.msra.mxu0 %v1356
      %1380 = vmatprep.subr.mxu0 0.0
      %1381 = vmatpush1.msra.mxu0 %v1357
      %1382 = vmatprep.subr.mxu0 0.0
      %1383 = vmatpush1.msra.mxu0 %v1358
      %1384 = vmatprep.subr.mxu0 0.0
      %1385 = vmatpush1.msra.mxu0 %v1359
      %1386 = vmatprep.subr.mxu0 0.0
      %1387 = vmatpush1.msra.mxu0 %v1360
      %1388 = vmatprep.subr.mxu0 0.0
      %1389 = vmatpush1.msra.mxu0 %v1361
      %1390 = vmatprep.subr.mxu0 0.0
      %1391 = vmatpush1.msra.mxu0 %v1362
      %1392 = vmatprep.subr.mxu0 0.0
      %1393 = vmatpush1.msra.mxu0 %v1363
      %1394 = vmatprep.subr.mxu0 0.0
      %1395 = vmatpush1.msra.mxu0 %v1364
      %1396 = vmatprep.subr.mxu0 0.0
      %1397 = vmatpush1.msra.mxu0 %v1365
      %1398 = vmatprep.subr.mxu0 0.0
      %1399 = vmatpush1.msra.mxu0 0.0
      %1400 = vmatprep.subr.mxu0 0.0
      %1401 = vmatpush1.msra.mxu0 0.0
      %1402 = vmatprep.subr.mxu0 0.0
      %1403 = vmatpush1.msra.mxu0 0.0
      %1404 = vmatprep.subr.mxu0 0.0
      %1405 = vmatpush1.msra.mxu0 0.0
      %1406 = vmatprep.subr.mxu0 0.0
      %1407 = vmatpush1.msra.mxu0 0.0
      %1408 = vmatprep.subr.mxu0 0.0
      %1409 = vmatpush1.msra.mxu0 0.0
      %1410 = vmatprep.subr.mxu0 0.0
      %1411 = vmatpush1.msra.mxu0 0.0
      %1412 = vmatprep.subr.mxu0 0.0
      %1413 = vmatpush1.msra.mxu0 0.0
      %1414 = vmatprep.subr.mxu0 0.0
      %1415 = vmatpush1.msra.mxu0 0.0
      %1416 = vmatprep.subr.mxu0 0.0
      %1417 = vmatpush1.msra.mxu0 0.0
      %1418 = vmatprep.subr.mxu0 0.0
      %1419 = vmatpush1.msra.mxu0 0.0
      %1420 = vmatprep.subr.mxu0 0.0
      %1421 = vmatpush1.msra.mxu0 0.0
      %1422 = vmatprep.subr.mxu0 0.0
      %1423 = vmatpush1.msra.mxu0 0.0
      %1424 = vmatprep.subr.mxu0 0.0
      %1425 = vmatpush1.msra.mxu0 0.0
      %1426 = vmatprep.subr.mxu0 0.0
      %1427 = vmatpush1.msra.mxu0 0.0
      %1428 = vmatprep.subr.mxu0 0.0
      %1429 = vmatpush1.msra.mxu0 0.0
      %1430 = vmatprep.mubr.f32.mxu0 0.0
      %1431 = vmatmul.mubr.f32.gmra.mrb[0].mxu0 %v749
      %v1432 = vpop.f32.mrb[0].mxu0
      %v1433 = vadd.f32 0.0, %v1432
      %v1434 = vpop.f32.mrb[0].mxu0
      %1435 = vmatprep.mubr.f32.mxu0 0.0
      %1436 = vmatmul.mubr.f32.gmra.mrb[0].mxu0 %v751
      %v1437 = vpop.f32.mrb[0].mxu0
      %v1438 = vadd.f32 0.0, %v1437
      %v1439 = vpop.f32.mrb[0].mxu0
      %1440 = vmatprep.mubr.f32.mxu0 0.0
      %1441 = vmatmul.mubr.f32.gmra.mrb[0].mxu0 %v754
      %v1442 = vpop.f32.mrb[0].mxu0
      %v1443 = vadd.f32 0.0, %v1442
      %v1444 = vpop.f32.mrb[0].mxu0
      %1445 = vmatprep.mubr.f32.mxu0 0.0
      %1446 = vmatmul.mubr.f32.gmra.mrb[0].mxu0 %v756
      %v1447 = vpop.f32.mrb[0].mxu0
      %v1448 = vadd.f32 0.0, %v1447
      %v1449 = vpop.f32.mrb[0].mxu0
      %1450 = vmatprep.mubr.f32.mxu0 0.0
      %1451 = vmatmul.mubr.f32.gmra.mrb[0].mxu0 %v759
      %v1452 = vpop.f32.mrb[0].mxu0
      %v1453 = vadd.f32 0.0, %v1452
      %v1454 = vpop.f32.mrb[0].mxu0
      %1455 = vmatprep.mubr.f32.mxu0 0.0
      %1456 = vmatmul.mubr.f32.gmra.mrb[0].mxu0 %v761
      %v1457 = vpop.f32.mrb[0].mxu0
      %v1458 = vadd.f32 0.0, %v1457
      %v1459 = vpop.f32.mrb[0].mxu0
      %1460 = vmatprep.mubr.f32.mxu0 0.0
      %1461 = vmatmul.mubr.f32.gmra.mrb[0].mxu0 %v764
      %v1462 = vpop.f32.mrb[0].mxu0
      %v1463 = vadd.f32 0.0, %v1462
      %v1464 = vpop.f32.mrb[0].mxu0
      %1465 = vmatprep.mubr.f32.mxu0 0.0
      %1466 = vmatmul.mubr.f32.gmra.mrb[0].mxu0 %v766
      %v1467 = vpop.f32.mrb[0].mxu0
      %v1468 = vadd.f32 0.0, %v1467
      %v1469 = vpop.f32.mrb[0].mxu0
      %1470 = vmatprep.mubr.f32.mxu0 0.0
      %1471 = vmatmul.mubr.f32.gmra.mrb[0].mxu0 %v769
      %v1472 = vpop.f32.mrb[0].mxu0
      %v1473 = vadd.f32 0.0, %v1472
      %v1474 = vpop.f32.mrb[0].mxu0
      %1475 = vmatprep.mubr.f32.mxu0 0.0
      %1476 = vmatmul.mubr.f32.gmra.mrb[0].mxu0 %v771
      %v1477 = vpop.f32.mrb[0].mxu0
      %v1478 = vadd.f32 0.0, %v1477
      %v1479 = vpop.f32.mrb[0].mxu0
      %1480 = vmatprep.mubr.f32.mxu0 0.0
      %1481 = vmatmul.mubr.f32.gmra.mrb[0].mxu0 %v774
      %v1482 = vpop.f32.mrb[0].mxu0
      %v1483 = vadd.f32 0.0, %v1482
      %v1484 = vpop.f32.mrb[0].mxu0
      %1485 = vmatprep.mubr.f32.mxu0 0.0
      %1486 = vmatmul.mubr.f32.gmra.mrb[0].mxu0 %v776
      %v1487 = vpop.f32.mrb[0].mxu0
      %v1488 = vadd.f32 0.0, %v1487
      %v1489 = vpop.f32.mrb[0].mxu0
      %1490 = vmatprep.mubr.f32.mxu0 0.0
      %1491 = vmatmul.mubr.f32.gmra.mrb[0].mxu0 %v779
      %v1492 = vpop.f32.mrb[0].mxu0
      %v1493 = vadd.f32 0.0, %v1492
      %v1494 = vpop.f32.mrb[0].mxu0
      %1495 = vmatprep.mubr.f32.mxu0 0.0
      %1496 = vmatmul.mubr.f32.gmra.mrb[0].mxu0 %v781
      %v1497 = vpop.f32.mrb[0].mxu0
      %v1498 = vadd.f32 0.0, %v1497
      %v1499 = vpop.f32.mrb[0].mxu0
      %1500 = vmatprep.mubr.f32.mxu0 0.0
      %1501 = vmatmul.mubr.f32.gmra.mrb[0].mxu0 %v1344
      %v1502 = vpop.f32.mrb[0].mxu0
      %v1503 = vadd.f32 0.0, %v1502
      %v1504 = vpop.f32.mrb[0].mxu0
      %1505 = vmatprep.mubr.f32.mxu0 0.0
      %1506 = vmatmul.mubr.f32.gmra.mrb[0].mxu0 %v1346
      %v1507 = vpop.f32.mrb[0].mxu0
      %v1508 = vadd.f32 0.0, %v1507
      %v1509 = vpop.f32.mrb[0].mxu0
      %1510 = vdwg.mxu0
      %v1511 = vadd.f32 %v1326, %v1433
      %v1512 = vadd.f32 %v1327, %v1438
      %v1513 = vadd.f32 %v1328, %v1443
      %v1514 = vadd.f32 %v1329, %v1448
      %v1515 = vadd.f32 %v1330, %v1453
      %v1516 = vadd.f32 %v1331, %v1458
      %v1517 = vadd.f32 %v1332, %v1463
      %v1518 = vadd.f32 %v1333, %v1468
      %v1519 = vadd.f32 %v1334, %v1473
      %v1520 = vadd.f32 %v1335, %v1478
      %v1521 = vadd.f32 %v1336, %v1483
      %v1522 = vadd.f32 %v1337, %v1488
      %v1523 = vadd.f32 %v1338, %v1493
      %v1524 = vadd.f32 %v1339, %v1498
      %v1525 = vadd.f32 %v1340, %v1503
      %v1526 = vadd.f32 %v1341, %v1508
      %s1527 = scalar_lea.vmem %s2, 768
      %v1528 = vld [vmem:[%s1527] sm:$0xff]
      %v1529 = vld [vmem:[%s1527 + $0x8] sm:$0xff]
      %v1530 = vld [vmem:[%s1527 + $0x10] sm:$0xff]
      %v1531 = vld [vmem:[%s1527 + $0x18] sm:$0xff]
      %v1532 = vld [vmem:[%s1527 + $0x20] sm:$0xff]
      %v1533 = vld [vmem:[%s1527 + $0x28] sm:$0xff]
      %v1534 = vld [vmem:[%s1527 + $0x30] sm:$0xff]
      %v1535 = vld [vmem:[%s1527 + $0x38] sm:$0xff]
      %v1536 = vld [vmem:[%s1527 + $0x40] sm:$0xff]
      %v1537 = vld [vmem:[%s1527 + $0x48] sm:$0xff]
      %v1538 = vld [vmem:[%s1527 + $0x50] sm:$0xff]
      %v1539 = vld [vmem:[%s1527 + $0x58] sm:$0xff]
      %v1540 = vld [vmem:[%s1527 + $0x60] sm:$0xff]
      %v1541 = vld [vmem:[%s1527 + $0x68] sm:$0xff]
      %v1542 = vld [vmem:[%s1527 + $0x70] sm:$0xff]
      %v1543 = vld [vmem:[%s1527 + $0x78] sm:$0xff]
      %1544 = vmatprep.subr.mxu0 0.0
      %1545 = vmatpush1.msra.mxu0 %v1528
      %1546 = vmatprep.subr.mxu0 0.0
      %1547 = vmatpush1.msra.mxu0 %v1529
      %1548 = vmatprep.subr.mxu0 0.0
      %1549 = vmatpush1.msra.mxu0 %v1530
      %1550 = vmatprep.subr.mxu0 0.0
      %1551 = vmatpush1.msra.mxu0 %v1531
      %1552 = vmatprep.subr.mxu0 0.0
      %1553 = vmatpush1.msra.mxu0 %v1532
      %1554 = vmatprep.subr.mxu0 0.0
      %1555 = vmatpush1.msra.mxu0 %v1533
      %1556 = vmatprep.subr.mxu0 0.0
      %1557 = vmatpush1.msra.mxu0 %v1534
      %1558 = vmatprep.subr.mxu0 0.0
      %1559 = vmatpush1.msra.mxu0 %v1535
      %1560 = vmatprep.subr.mxu0 0.0
      %1561 = vmatpush1.msra.mxu0 %v1536
      %1562 = vmatprep.subr.mxu0 0.0
      %1563 = vmatpush1.msra.mxu0 %v1537
      %1564 = vmatprep.subr.mxu0 0.0
      %1565 = vmatpush1.msra.mxu0 %v1538
      %1566 = vmatprep.subr.mxu0 0.0
      %1567 = vmatpush1.msra.mxu0 %v1539
      %1568 = vmatprep.subr.mxu0 0.0
      %1569 = vmatpush1.msra.mxu0 %v1540
      %1570 = vmatprep.subr.mxu0 0.0
      %1571 = vmatpush1.msra.mxu0 %v1541
      %1572 = vmatprep.subr.mxu0 0.0
      %1573 = vmatpush1.msra.mxu0 %v1542
      %1574 = vmatprep.subr.mxu0 0.0
      %1575 = vmatpush1.msra.mxu0 %v1543
      %1576 = vmatprep.subr.mxu0 0.0
      %1577 = vmatpush1.msra.mxu0 0.0
      %1578 = vmatprep.subr.mxu0 0.0
      %1579 = vmatpush1.msra.mxu0 0.0
      %1580 = vmatprep.subr.mxu0 0.0
      %1581 = vmatpush1.msra.mxu0 0.0
      %1582 = vmatprep.subr.mxu0 0.0
      %1583 = vmatpush1.msra.mxu0 0.0
      %1584 = vmatprep.subr.mxu0 0.0
      %1585 = vmatpush1.msra.mxu0 0.0
      %1586 = vmatprep.subr.mxu0 0.0
      %1587 = vmatpush1.msra.mxu0 0.0
      %1588 = vmatprep.subr.mxu0 0.0
      %1589 = vmatpush1.msra.mxu0 0.0
      %1590 = vmatprep.subr.mxu0 0.0
      %1591 = vmatpush1.msra.mxu0 0.0
      %1592 = vmatprep.subr.mxu0 0.0
      %1593 = vmatpush1.msra.mxu0 0.0
      %1594 = vmatprep.subr.mxu0 0.0
      %1595 = vmatpush1.msra.mxu0 0.0
      %1596 = vmatprep.subr.mxu0 0.0
      %1597 = vmatpush1.msra.mxu0 0.0
      %1598 = vmatprep.subr.mxu0 0.0
      %1599 = vmatpush1.msra.mxu0 0.0
      %1600 = vmatprep.subr.mxu0 0.0
      %1601 = vmatpush1.msra.mxu0 0.0
      %1602 = vmatprep.subr.mxu0 0.0
      %1603 = vmatpush1.msra.mxu0 0.0
      %1604 = vmatprep.subr.mxu0 0.0
      %1605 = vmatpush1.msra.mxu0 0.0
      %1606 = vmatprep.subr.mxu0 0.0
      %1607 = vmatpush1.msra.mxu0 0.0
      %1608 = vmatprep.mubr.f32.mxu0 0.0
      %1609 = vmatmul.mubr.f32.gmra.mrb[0].mxu0 %v313
      %v1610 = vpop.f32.mrb[0].mxu0
      %v1611 = vadd.f32 0.0, %v1610
      %v1612 = vpop.f32.mrb[0].mxu0
      %1613 = vmatprep.mubr.f32.mxu0 0.0
      %1614 = vmatmul.mubr.f32.gmra.mrb[0].mxu0 %v314
      %v1615 = vpop.f32.mrb[0].mxu0
      %v1616 = vadd.f32 0.0, %v1615
      %v1617 = vpop.f32.mrb[0].mxu0
      %1618 = vmatprep.mubr.f32.mxu0 0.0
      %1619 = vmatmul.mubr.f32.gmra.mrb[0].mxu0 %v316
      %v1620 = vpop.f32.mrb[0].mxu0
      %v1621 = vadd.f32 0.0, %v1620
      %v1622 = vpop.f32.mrb[0].mxu0
      %1623 = vmatprep.mubr.f32.mxu0 0.0
      %1624 = vmatmul.mubr.f32.gmra.mrb[0].mxu0 %v317
      %v1625 = vpop.f32.mrb[0].mxu0
      %v1626 = vadd.f32 0.0, %v1625
      %v1627 = vpop.f32.mrb[0].mxu0
      %1628 = vmatprep.mubr.f32.mxu0 0.0
      %1629 = vmatmul.mubr.f32.gmra.mrb[0].mxu0 %v319
      %v1630 = vpop.f32.mrb[0].mxu0
      %v1631 = vadd.f32 0.0, %v1630
      %v1632 = vpop.f32.mrb[0].mxu0
      %1633 = vmatprep.mubr.f32.mxu0 0.0
      %1634 = vmatmul.mubr.f32.gmra.mrb[0].mxu0 %v320
      %v1635 = vpop.f32.mrb[0].mxu0
      %v1636 = vadd.f32 0.0, %v1635
      %v1637 = vpop.f32.mrb[0].mxu0
      %1638 = vmatprep.mubr.f32.mxu0 0.0
      %1639 = vmatmul.mubr.f32.gmra.mrb[0].mxu0 %v322
      %v1640 = vpop.f32.mrb[0].mxu0
      %v1641 = vadd.f32 0.0, %v1640
      %v1642 = vpop.f32.mrb[0].mxu0
      %1643 = vmatprep.mubr.f32.mxu0 0.0
      %1644 = vmatmul.mubr.f32.gmra.mrb[0].mxu0 %v323
      %v1645 = vpop.f32.mrb[0].mxu0
      %v1646 = vadd.f32 0.0, %v1645
      %v1647 = vpop.f32.mrb[0].mxu0
      %1648 = vmatprep.mubr.f32.mxu0 0.0
      %1649 = vmatmul.mubr.f32.gmra.mrb[0].mxu0 %v325
      %v1650 = vpop.f32.mrb[0].mxu0
      %v1651 = vadd.f32 0.0, %v1650
      %v1652 = vpop.f32.mrb[0].mxu0
      %1653 = vmatprep.mubr.f32.mxu0 0.0
      %1654 = vmatmul.mubr.f32.gmra.mrb[0].mxu0 %v326
      %v1655 = vpop.f32.mrb[0].mxu0
      %v1656 = vadd.f32 0.0, %v1655
      %v1657 = vpop.f32.mrb[0].mxu0
      %1658 = vmatprep.mubr.f32.mxu0 0.0
      %1659 = vmatmul.mubr.f32.gmra.mrb[0].mxu0 %v328
      %v1660 = vpop.f32.mrb[0].mxu0
      %v1661 = vadd.f32 0.0, %v1660
      %v1662 = vpop.f32.mrb[0].mxu0
      %1663 = vmatprep.mubr.f32.mxu0 0.0
      %1664 = vmatmul.mubr.f32.gmra.mrb[0].mxu0 %v329
      %v1665 = vpop.f32.mrb[0].mxu0
      %v1666 = vadd.f32 0.0, %v1665
      %v1667 = vpop.f32.mrb[0].mxu0
      %1668 = vmatprep.mubr.f32.mxu0 0.0
      %1669 = vmatmul.mubr.f32.gmra.mrb[0].mxu0 %v331
      %v1670 = vpop.f32.mrb[0].mxu0
      %v1671 = vadd.f32 0.0, %v1670
      %v1672 = vpop.f32.mrb[0].mxu0
      %1673 = vmatprep.mubr.f32.mxu0 0.0
      %1674 = vmatmul.mubr.f32.gmra.mrb[0].mxu0 %v332
      %v1675 = vpop.f32.mrb[0].mxu0
      %v1676 = vadd.f32 0.0, %v1675
      %v1677 = vpop.f32.mrb[0].mxu0
      %1678 = vmatprep.mubr.f32.mxu0 0.0
      %1679 = vmatmul.mubr.f32.gmra.mrb[0].mxu0 %v334
      %v1680 = vpop.f32.mrb[0].mxu0
      %v1681 = vadd.f32 0.0, %v1680
      %v1682 = vpop.f32.mrb[0].mxu0
      %1683 = vmatprep.mubr.f32.mxu0 0.0
      %1684 = vmatmul.mubr.f32.gmra.mrb[0].mxu0 %v335
      %v1685 = vpop.f32.mrb[0].mxu0
      %v1686 = vadd.f32 0.0, %v1685
      %v1687 = vpop.f32.mrb[0].mxu0
      %1688 = vdwg.mxu0
      %v1689 = vadd.f32 %v1511, %v1611
      %v1690 = vadd.f32 %v1512, %v1616
      %v1691 = vadd.f32 %v1513, %v1621
      %v1692 = vadd.f32 %v1514, %v1626
      %v1693 = vadd.f32 %v1515, %v1631
      %v1694 = vadd.f32 %v1516, %v1636
      %v1695 = vadd.f32 %v1517, %v1641
      %v1696 = vadd.f32 %v1518, %v1646
      %v1697 = vadd.f32 %v1519, %v1651
      %v1698 = vadd.f32 %v1520, %v1656
      %v1699 = vadd.f32 %v1521, %v1661
      %v1700 = vadd.f32 %v1522, %v1666
      %v1701 = vadd.f32 %v1523, %v1671
      %v1702 = vadd.f32 %v1524, %v1676
      %v1703 = vadd.f32 %v1525, %v1681
      %v1704 = vadd.f32 %v1526, %v1686
      %v1708 = vrot.slane %v334, 1
      %v1709 = vrot.slane %v335, 1
      %v1710 = vsel %vm377, %v1708, %v1709
      %v1711 = vrot.slane %v336, 1
      %v1712 = vsel %vm377, %v1709, %v1711
      %s1715 = scalar_lea.vmem %s2, 896
      %v1716 = vld [vmem:[%s1715] sm:$0xff]
      %v1717 = vld [vmem:[%s1715 + $0x8] sm:$0xff]
      %v1718 = vld [vmem:[%s1715 + $0x10] sm:$0xff]
      %v1719 = vld [vmem:[%s1715 + $0x18] sm:$0xff]
      %v1720 = vld [vmem:[%s1715 + $0x20] sm:$0xff]
      %v1721 = vld [vmem:[%s1715 + $0x28] sm:$0xff]
      %v1722 = vld [vmem:[%s1715 + $0x30] sm:$0xff]
      %v1723 = vld [vmem:[%s1715 + $0x38] sm:$0xff]
      %v1724 = vld [vmem:[%s1715 + $0x40] sm:$0xff]
      %v1725 = vld [vmem:[%s1715 + $0x48] sm:$0xff]
      %v1726 = vld [vmem:[%s1715 + $0x50] sm:$0xff]
      %v1727 = vld [vmem:[%s1715 + $0x58] sm:$0xff]
      %v1728 = vld [vmem:[%s1715 + $0x60] sm:$0xff]
      %v1729 = vld [vmem:[%s1715 + $0x68] sm:$0xff]
      %v1730 = vld [vmem:[%s1715 + $0x70] sm:$0xff]
      %v1731 = vld [vmem:[%s1715 + $0x78] sm:$0xff]
      %1732 = vmatprep.subr.mxu0 0.0
      %1733 = vmatpush1.msra.mxu0 %v1716
      %1734 = vmatprep.subr.mxu0 0.0
      %1735 = vmatpush1.msra.mxu0 %v1717
      %1736 = vmatprep.subr.mxu0 0.0
      %1737 = vmatpush1.msra.mxu0 %v1718
      %1738 = vmatprep.subr.mxu0 0.0
      %1739 = vmatpush1.msra.mxu0 %v1719
      %1740 = vmatprep.subr.mxu0 0.0
      %1741 = vmatpush1.msra.mxu0 %v1720
      %1742 = vmatprep.subr.mxu0 0.0
      %1743 = vmatpush1.msra.mxu0 %v1721
      %1744 = vmatprep.subr.mxu0 0.0
      %1745 = vmatpush1.msra.mxu0 %v1722
      %1746 = vmatprep.subr.mxu0 0.0
      %1747 = vmatpush1.msra.mxu0 %v1723
      %1748 = vmatprep.subr.mxu0 0.0
      %1749 = vmatpush1.msra.mxu0 %v1724
      %1750 = vmatprep.subr.mxu0 0.0
      %1751 = vmatpush1.msra.mxu0 %v1725
      %1752 = vmatprep.subr.mxu0 0.0
      %1753 = vmatpush1.msra.mxu0 %v1726
      %1754 = vmatprep.subr.mxu0 0.0
      %1755 = vmatpush1.msra.mxu0 %v1727
      %1756 = vmatprep.subr.mxu0 0.0
      %1757 = vmatpush1.msra.mxu0 %v1728
      %1758 = vmatprep.subr.mxu0 0.0
      %1759 = vmatpush1.msra.mxu0 %v1729
      %1760 = vmatprep.subr.mxu0 0.0
      %1761 = vmatpush1.msra.mxu0 %v1730
      %1762 = vmatprep.subr.mxu0 0.0
      %1763 = vmatpush1.msra.mxu0 %v1731
      %1764 = vmatprep.subr.mxu0 0.0
      %1765 = vmatpush1.msra.mxu0 0.0
      %1766 = vmatprep.subr.mxu0 0.0
      %1767 = vmatpush1.msra.mxu0 0.0
      %1768 = vmatprep.subr.mxu0 0.0
      %1769 = vmatpush1.msra.mxu0 0.0
      %1770 = vmatprep.subr.mxu0 0.0
      %1771 = vmatpush1.msra.mxu0 0.0
      %1772 = vmatprep.subr.mxu0 0.0
      %1773 = vmatpush1.msra.mxu0 0.0
      %1774 = vmatprep.subr.mxu0 0.0
      %1775 = vmatpush1.msra.mxu0 0.0
      %1776 = vmatprep.subr.mxu0 0.0
      %1777 = vmatpush1.msra.mxu0 0.0
      %1778 = vmatprep.subr.mxu0 0.0
      %1779 = vmatpush1.msra.mxu0 0.0
      %1780 = vmatprep.subr.mxu0 0.0
      %1781 = vmatpush1.msra.mxu0 0.0
      %1782 = vmatprep.subr.mxu0 0.0
      %1783 = vmatpush1.msra.mxu0 0.0
      %1784 = vmatprep.subr.mxu0 0.0
      %1785 = vmatpush1.msra.mxu0 0.0
      %1786 = vmatprep.subr.mxu0 0.0
      %1787 = vmatpush1.msra.mxu0 0.0
      %1788 = vmatprep.subr.mxu0 0.0
      %1789 = vmatpush1.msra.mxu0 0.0
      %1790 = vmatprep.subr.mxu0 0.0
      %1791 = vmatpush1.msra.mxu0 0.0
      %1792 = vmatprep.subr.mxu0 0.0
      %1793 = vmatpush1.msra.mxu0 0.0
      %1794 = vmatprep.subr.mxu0 0.0
      %1795 = vmatpush1.msra.mxu0 0.0
      %1796 = vmatprep.mubr.f32.mxu0 0.0
      %1797 = vmatmul.mubr.f32.gmra.mrb[0].mxu0 %v390
      %v1798 = vpop.f32.mrb[0].mxu0
      %v1799 = vadd.f32 0.0, %v1798
      %v1800 = vpop.f32.mrb[0].mxu0
      %1801 = vmatprep.mubr.f32.mxu0 0.0
      %1802 = vmatmul.mubr.f32.gmra.mrb[0].mxu0 %v392
      %v1803 = vpop.f32.mrb[0].mxu0
      %v1804 = vadd.f32 0.0, %v1803
      %v1805 = vpop.f32.mrb[0].mxu0
      %1806 = vmatprep.mubr.f32.mxu0 0.0
      %1807 = vmatmul.mubr.f32.gmra.mrb[0].mxu0 %v395
      %v1808 = vpop.f32.mrb[0].mxu0
      %v1809 = vadd.f32 0.0, %v1808
      %v1810 = vpop.f32.mrb[0].mxu0
      %1811 = vmatprep.mubr.f32.mxu0 0.0
      %1812 = vmatmul.mubr.f32.gmra.mrb[0].mxu0 %v397
      %v1813 = vpop.f32.mrb[0].mxu0
      %v1814 = vadd.f32 0.0, %v1813
      %v1815 = vpop.f32.mrb[0].mxu0
      %1816 = vmatprep.mubr.f32.mxu0 0.0
      %1817 = vmatmul.mubr.f32.gmra.mrb[0].mxu0 %v400
      %v1818 = vpop.f32.mrb[0].mxu0
      %v1819 = vadd.f32 0.0, %v1818
      %v1820 = vpop.f32.mrb[0].mxu0
      %1821 = vmatprep.mubr.f32.mxu0 0.0
      %1822 = vmatmul.mubr.f32.gmra.mrb[0].mxu0 %v402
      %v1823 = vpop.f32.mrb[0].mxu0
      %v1824 = vadd.f32 0.0, %v1823
      %v1825 = vpop.f32.mrb[0].mxu0
      %1826 = vmatprep.mubr.f32.mxu0 0.0
      %1827 = vmatmul.mubr.f32.gmra.mrb[0].mxu0 %v405
      %v1828 = vpop.f32.mrb[0].mxu0
      %v1829 = vadd.f32 0.0, %v1828
      %v1830 = vpop.f32.mrb[0].mxu0
      %1831 = vmatprep.mubr.f32.mxu0 0.0
      %1832 = vmatmul.mubr.f32.gmra.mrb[0].mxu0 %v407
      %v1833 = vpop.f32.mrb[0].mxu0
      %v1834 = vadd.f32 0.0, %v1833
      %v1835 = vpop.f32.mrb[0].mxu0
      %1836 = vmatprep.mubr.f32.mxu0 0.0
      %1837 = vmatmul.mubr.f32.gmra.mrb[0].mxu0 %v410
      %v1838 = vpop.f32.mrb[0].mxu0
      %v1839 = vadd.f32 0.0, %v1838
      %v1840 = vpop.f32.mrb[0].mxu0
      %1841 = vmatprep.mubr.f32.mxu0 0.0
      %1842 = vmatmul.mubr.f32.gmra.mrb[0].mxu0 %v412
      %v1843 = vpop.f32.mrb[0].mxu0
      %v1844 = vadd.f32 0.0, %v1843
      %v1845 = vpop.f32.mrb[0].mxu0
      %1846 = vmatprep.mubr.f32.mxu0 0.0
      %1847 = vmatmul.mubr.f32.gmra.mrb[0].mxu0 %v415
      %v1848 = vpop.f32.mrb[0].mxu0
      %v1849 = vadd.f32 0.0, %v1848
      %v1850 = vpop.f32.mrb[0].mxu0
      %1851 = vmatprep.mubr.f32.mxu0 0.0
      %1852 = vmatmul.mubr.f32.gmra.mrb[0].mxu0 %v417
      %v1853 = vpop.f32.mrb[0].mxu0
      %v1854 = vadd.f32 0.0, %v1853
      %v1855 = vpop.f32.mrb[0].mxu0
      %1856 = vmatprep.mubr.f32.mxu0 0.0
      %1857 = vmatmul.mubr.f32.gmra.mrb[0].mxu0 %v1159
      %v1858 = vpop.f32.mrb[0].mxu0
      %v1859 = vadd.f32 0.0, %v1858
      %v1860 = vpop.f32.mrb[0].mxu0
      %1861 = vmatprep.mubr.f32.mxu0 0.0
      %1862 = vmatmul.mubr.f32.gmra.mrb[0].mxu0 %v1161
      %v1863 = vpop.f32.mrb[0].mxu0
      %v1864 = vadd.f32 0.0, %v1863
      %v1865 = vpop.f32.mrb[0].mxu0
      %1866 = vmatprep.mubr.f32.mxu0 0.0
      %1867 = vmatmul.mubr.f32.gmra.mrb[0].mxu0 %v1710
      %v1868 = vpop.f32.mrb[0].mxu0
      %v1869 = vadd.f32 0.0, %v1868
      %v1870 = vpop.f32.mrb[0].mxu0
      %1871 = vmatprep.mubr.f32.mxu0 0.0
      %1872 = vmatmul.mubr.f32.gmra.mrb[0].mxu0 %v1712
      %v1873 = vpop.f32.mrb[0].mxu0
      %v1874 = vadd.f32 0.0, %v1873
      %v1875 = vpop.f32.mrb[0].mxu0
      %1876 = vdwg.mxu0
      %v1877 = vadd.f32 %v1689, %v1799
      %v1878 = vadd.f32 %v1690, %v1804
      %v1879 = vadd.f32 %v1691, %v1809
      %v1880 = vadd.f32 %v1692, %v1814
      %v1881 = vadd.f32 %v1693, %v1819
      %v1882 = vadd.f32 %v1694, %v1824
      %v1883 = vadd.f32 %v1695, %v1829
      %v1884 = vadd.f32 %v1696, %v1834
      %v1885 = vadd.f32 %v1697, %v1839
      %v1886 = vadd.f32 %v1698, %v1844
      %v1887 = vadd.f32 %v1699, %v1849
      %v1888 = vadd.f32 %v1700, %v1854
      %v1889 = vadd.f32 %v1701, %v1859
      %v1890 = vadd.f32 %v1702, %v1864
      %v1891 = vadd.f32 %v1703, %v1869
      %v1892 = vadd.f32 %v1704, %v1874
      %v1893 = vrot.slane %v334, 2
      %v1894 = vrot.slane %v335, 2
      %v1895 = vsel %vm741, %v1893, %v1894
      %v1896 = vrot.slane %v336, 2
      %v1897 = vsel %vm741, %v1894, %v1896
      %s1900 = scalar_lea.vmem %s2, 1024
      %v1901 = vld [vmem:[%s1900] sm:$0xff]
      %v1902 = vld [vmem:[%s1900 + $0x8] sm:$0xff]
      %v1903 = vld [vmem:[%s1900 + $0x10] sm:$0xff]
      %v1904 = vld [vmem:[%s1900 + $0x18] sm:$0xff]
      %v1905 = vld [vmem:[%s1900 + $0x20] sm:$0xff]
      %v1906 = vld [vmem:[%s1900 + $0x28] sm:$0xff]
      %v1907 = vld [vmem:[%s1900 + $0x30] sm:$0xff]
      %v1908 = vld [vmem:[%s1900 + $0x38] sm:$0xff]
      %v1909 = vld [vmem:[%s1900 + $0x40] sm:$0xff]
      %v1910 = vld [vmem:[%s1900 + $0x48] sm:$0xff]
      %v1911 = vld [vmem:[%s1900 + $0x50] sm:$0xff]
      %v1912 = vld [vmem:[%s1900 + $0x58] sm:$0xff]
      %v1913 = vld [vmem:[%s1900 + $0x60] sm:$0xff]
      %v1914 = vld [vmem:[%s1900 + $0x68] sm:$0xff]
      %v1915 = vld [vmem:[%s1900 + $0x70] sm:$0xff]
      %v1916 = vld [vmem:[%s1900 + $0x78] sm:$0xff]
      %1917 = vmatprep.subr.mxu0 0.0
      %1918 = vmatpush1.msra.mxu0 %v1901
      %1919 = vmatprep.subr.mxu0 0.0
      %1920 = vmatpush1.msra.mxu0 %v1902
      %1921 = vmatprep.subr.mxu0 0.0
      %1922 = vmatpush1.msra.mxu0 %v1903
      %1923 = vmatprep.subr.mxu0 0.0
      %1924 = vmatpush1.msra.mxu0 %v1904
      %1925 = vmatprep.subr.mxu0 0.0
      %1926 = vmatpush1.msra.mxu0 %v1905
      %1927 = vmatprep.subr.mxu0 0.0
      %1928 = vmatpush1.msra.mxu0 %v1906
      %1929 = vmatprep.subr.mxu0 0.0
      %1930 = vmatpush1.msra.mxu0 %v1907
      %1931 = vmatprep.subr.mxu0 0.0
      %1932 = vmatpush1.msra.mxu0 %v1908
      %1933 = vmatprep.subr.mxu0 0.0
      %1934 = vmatpush1.msra.mxu0 %v1909
      %1935 = vmatprep.subr.mxu0 0.0
      %1936 = vmatpush1.msra.mxu0 %v1910
      %1937 = vmatprep.subr.mxu0 0.0
      %1938 = vmatpush1.msra.mxu0 %v1911
      %1939 = vmatprep.subr.mxu0 0.0
      %1940 = vmatpush1.msra.mxu0 %v1912
      %1941 = vmatprep.subr.mxu0 0.0
      %1942 = vmatpush1.msra.mxu0 %v1913
      %1943 = vmatprep.subr.mxu0 0.0
      %1944 = vmatpush1.msra.mxu0 %v1914
      %1945 = vmatprep.subr.mxu0 0.0
      %1946 = vmatpush1.msra.mxu0 %v1915
      %1947 = vmatprep.subr.mxu0 0.0
      %1948 = vmatpush1.msra.mxu0 %v1916
      %1949 = vmatprep.subr.mxu0 0.0
      %1950 = vmatpush1.msra.mxu0 0.0
      %1951 = vmatprep.subr.mxu0 0.0
      %1952 = vmatpush1.msra.mxu0 0.0
      %1953 = vmatprep.subr.mxu0 0.0
      %1954 = vmatpush1.msra.mxu0 0.0
      %1955 = vmatprep.subr.mxu0 0.0
      %1956 = vmatpush1.msra.mxu0 0.0
      %1957 = vmatprep.subr.mxu0 0.0
      %1958 = vmatpush1.msra.mxu0 0.0
      %1959 = vmatprep.subr.mxu0 0.0
      %1960 = vmatpush1.msra.mxu0 0.0
      %1961 = vmatprep.subr.mxu0 0.0
      %1962 = vmatpush1.msra.mxu0 0.0
      %1963 = vmatprep.subr.mxu0 0.0
      %1964 = vmatpush1.msra.mxu0 0.0
      %1965 = vmatprep.subr.mxu0 0.0
      %1966 = vmatpush1.msra.mxu0 0.0
      %1967 = vmatprep.subr.mxu0 0.0
      %1968 = vmatpush1.msra.mxu0 0.0
      %1969 = vmatprep.subr.mxu0 0.0
      %1970 = vmatpush1.msra.mxu0 0.0
      %1971 = vmatprep.subr.mxu0 0.0
      %1972 = vmatpush1.msra.mxu0 0.0
      %1973 = vmatprep.subr.mxu0 0.0
      %1974 = vmatpush1.msra.mxu0 0.0
      %1975 = vmatprep.subr.mxu0 0.0
      %1976 = vmatpush1.msra.mxu0 0.0
      %1977 = vmatprep.subr.mxu0 0.0
      %1978 = vmatpush1.msra.mxu0 0.0
      %1979 = vmatprep.subr.mxu0 0.0
      %1980 = vmatpush1.msra.mxu0 0.0
      %1981 = vmatprep.mubr.f32.mxu0 0.0
      %1982 = vmatmul.mubr.f32.gmra.mrb[0].mxu0 %v754
      %v1983 = vpop.f32.mrb[0].mxu0
      %v1984 = vadd.f32 0.0, %v1983
      %v1985 = vpop.f32.mrb[0].mxu0
      %1986 = vmatprep.mubr.f32.mxu0 0.0
      %1987 = vmatmul.mubr.f32.gmra.mrb[0].mxu0 %v756
      %v1988 = vpop.f32.mrb[0].mxu0
      %v1989 = vadd.f32 0.0, %v1988
      %v1990 = vpop.f32.mrb[0].mxu0
      %1991 = vmatprep.mubr.f32.mxu0 0.0
      %1992 = vmatmul.mubr.f32.gmra.mrb[0].mxu0 %v759
      %v1993 = vpop.f32.mrb[0].mxu0
      %v1994 = vadd.f32 0.0, %v1993
      %v1995 = vpop.f32.mrb[0].mxu0
      %1996 = vmatprep.mubr.f32.mxu0 0.0
      %1997 = vmatmul.mubr.f32.gmra.mrb[0].mxu0 %v761
      %v1998 = vpop.f32.mrb[0].mxu0
      %v1999 = vadd.f32 0.0, %v1998
      %v2000 = vpop.f32.mrb[0].mxu0
      %2001 = vmatprep.mubr.f32.mxu0 0.0
      %2002 = vmatmul.mubr.f32.gmra.mrb[0].mxu0 %v764
      %v2003 = vpop.f32.mrb[0].mxu0
      %v2004 = vadd.f32 0.0, %v2003
      %v2005 = vpop.f32.mrb[0].mxu0
      %2006 = vmatprep.mubr.f32.mxu0 0.0
      %2007 = vmatmul.mubr.f32.gmra.mrb[0].mxu0 %v766
      %v2008 = vpop.f32.mrb[0].mxu0
      %v2009 = vadd.f32 0.0, %v2008
      %v2010 = vpop.f32.mrb[0].mxu0
      %2011 = vmatprep.mubr.f32.mxu0 0.0
      %2012 = vmatmul.mubr.f32.gmra.mrb[0].mxu0 %v769
      %v2013 = vpop.f32.mrb[0].mxu0
      %v2014 = vadd.f32 0.0, %v2013
      %v2015 = vpop.f32.mrb[0].mxu0
      %2016 = vmatprep.mubr.f32.mxu0 0.0
      %2017 = vmatmul.mubr.f32.gmra.mrb[0].mxu0 %v771
      %v2018 = vpop.f32.mrb[0].mxu0
      %v2019 = vadd.f32 0.0, %v2018
      %v2020 = vpop.f32.mrb[0].mxu0
      %2021 = vmatprep.mubr.f32.mxu0 0.0
      %2022 = vmatmul.mubr.f32.gmra.mrb[0].mxu0 %v774
      %v2023 = vpop.f32.mrb[0].mxu0
      %v2024 = vadd.f32 0.0, %v2023
      %v2025 = vpop.f32.mrb[0].mxu0
      %2026 = vmatprep.mubr.f32.mxu0 0.0
      %2027 = vmatmul.mubr.f32.gmra.mrb[0].mxu0 %v776
      %v2028 = vpop.f32.mrb[0].mxu0
      %v2029 = vadd.f32 0.0, %v2028
      %v2030 = vpop.f32.mrb[0].mxu0
      %2031 = vmatprep.mubr.f32.mxu0 0.0
      %2032 = vmatmul.mubr.f32.gmra.mrb[0].mxu0 %v779
      %v2033 = vpop.f32.mrb[0].mxu0
      %v2034 = vadd.f32 0.0, %v2033
      %v2035 = vpop.f32.mrb[0].mxu0
      %2036 = vmatprep.mubr.f32.mxu0 0.0
      %2037 = vmatmul.mubr.f32.gmra.mrb[0].mxu0 %v781
      %v2038 = vpop.f32.mrb[0].mxu0
      %v2039 = vadd.f32 0.0, %v2038
      %v2040 = vpop.f32.mrb[0].mxu0
      %2041 = vmatprep.mubr.f32.mxu0 0.0
      %2042 = vmatmul.mubr.f32.gmra.mrb[0].mxu0 %v1344
      %v2043 = vpop.f32.mrb[0].mxu0
      %v2044 = vadd.f32 0.0, %v2043
      %v2045 = vpop.f32.mrb[0].mxu0
      %2046 = vmatprep.mubr.f32.mxu0 0.0
      %2047 = vmatmul.mubr.f32.gmra.mrb[0].mxu0 %v1346
      %v2048 = vpop.f32.mrb[0].mxu0
      %v2049 = vadd.f32 0.0, %v2048
      %v2050 = vpop.f32.mrb[0].mxu0
      %2051 = vmatprep.mubr.f32.mxu0 0.0
      %2052 = vmatmul.mubr.f32.gmra.mrb[0].mxu0 %v1895
      %v2053 = vpop.f32.mrb[0].mxu0
      %v2054 = vadd.f32 0.0, %v2053
      %v2055 = vpop.f32.mrb[0].mxu0
      %2056 = vmatprep.mubr.f32.mxu0 0.0
      %2057 = vmatmul.mubr.f32.gmra.mrb[0].mxu0 %v1897
      %v2058 = vpop.f32.mrb[0].mxu0
      %v2059 = vadd.f32 0.0, %v2058
      %v2060 = vpop.f32.mrb[0].mxu0
      %2061 = vdwg.mxu0
      %v2062 = vadd.f32 %v1877, %v1984
      %v2063 = vadd.f32 %v1878, %v1989
      %v2064 = vadd.f32 %v1879, %v1994
      %v2065 = vadd.f32 %v1880, %v1999
      %v2066 = vadd.f32 %v1881, %v2004
      %v2067 = vadd.f32 %v1882, %v2009
      %v2068 = vadd.f32 %v1883, %v2014
      %v2069 = vadd.f32 %v1884, %v2019
      %v2070 = vadd.f32 %v1885, %v2024
      %v2071 = vadd.f32 %v1886, %v2029
      %v2072 = vadd.f32 %v1887, %v2034
      %v2073 = vadd.f32 %v1888, %v2039
      %v2074 = vadd.f32 %v1889, %v2044
      %v2075 = vadd.f32 %v1890, %v2049
      %v2076 = vadd.f32 %v1891, %v2054
      %v2077 = vadd.f32 %v1892, %v2059
      %2078 = vst [vmem:[%s295] sm:$0xff] %v2062
      %2079 = vst [vmem:[%s295 + $0x8] sm:$0xff] %v2063
      %2080 = vst [vmem:[%s295 + $0x10] sm:$0xff] %v2064
      %2081 = vst [vmem:[%s295 + $0x18] sm:$0xff] %v2065
      %2082 = vst [vmem:[%s295 + $0x20] sm:$0xff] %v2066
      %2083 = vst [vmem:[%s295 + $0x28] sm:$0xff] %v2067
      %2084 = vst [vmem:[%s295 + $0x30] sm:$0xff] %v2068
      %2085 = vst [vmem:[%s295 + $0x38] sm:$0xff] %v2069
      %2086 = vst [vmem:[%s295 + $0x40] sm:$0xff] %v2070
      %2087 = vst [vmem:[%s295 + $0x48] sm:$0xff] %v2071
      %2088 = vst [vmem:[%s295 + $0x50] sm:$0xff] %v2072
      %2089 = vst [vmem:[%s295 + $0x58] sm:$0xff] %v2073
      %2090 = vst [vmem:[%s295 + $0x60] sm:$0xff] %v2074
      %2091 = vst [vmem:[%s295 + $0x68] sm:$0xff] %v2075
      %2092 = vst [vmem:[%s295 + $0x70] sm:$0xff] %v2076
      %2093 = vst [vmem:[%s295 + $0x78] sm:$0xff] %v2077
      %v2094 = vadd.f32 %v2062, %v2063
      %v2095 = vadd.f32 %v2094, %v2064
      %v2096 = vadd.f32 %v2095, %v2065
      %v2097 = vadd.f32 %v2096, %v2066
      %v2098 = vadd.f32 %v2097, %v2067
      %v2099 = vadd.f32 %v2098, %v2068
      %v2100 = vadd.f32 %v2099, %v2069
      %v2101 = vadd.f32 %v2100, %v2070
      %v2102 = vadd.f32 %v2101, %v2071
      %v2103 = vadd.f32 %v2102, %v2072
      %v2104 = vadd.f32 %v2103, %v2073
      %v2105 = vadd.f32 %v2104, %v2074
      %v2106 = vadd.f32 %v2105, %v2075
      %v2107 = vadd.f32 %v2106, %v2076
      %v2108 = vadd.f32 %v2107, %v2077
      %v2109 = vrot.slane %v2108, 4
      %v2110 = vadd.f32 %v2108, %v2109
      %v2111 = vrot.slane %v2110, 2
      %v2112 = vadd.f32 %v2110, %v2111
      %v2113 = vrot.slane %v2112, 1
      %v2114 = vadd.f32 %v2112, %v2113
      %v2115 = vmul.f32 %v2062, %v2062
      %v2116 = vmul.f32 %v2063, %v2063
      %v2117 = vmul.f32 %v2064, %v2064
      %v2118 = vmul.f32 %v2065, %v2065
      %v2119 = vmul.f32 %v2066, %v2066
      %v2120 = vmul.f32 %v2067, %v2067
      %v2121 = vmul.f32 %v2068, %v2068
      %v2122 = vmul.f32 %v2069, %v2069
      %v2123 = vmul.f32 %v2070, %v2070
      %v2124 = vmul.f32 %v2071, %v2071
      %v2125 = vmul.f32 %v2072, %v2072
      %v2126 = vmul.f32 %v2073, %v2073
      %v2127 = vmul.f32 %v2074, %v2074
      %v2128 = vmul.f32 %v2075, %v2075
      %v2129 = vmul.f32 %v2076, %v2076
      %v2130 = vmul.f32 %v2077, %v2077
      %v2131 = vadd.f32 %v2115, %v2116
      %v2132 = vadd.f32 %v2131, %v2117
      %v2133 = vadd.f32 %v2132, %v2118
      %v2134 = vadd.f32 %v2133, %v2119
      %v2135 = vadd.f32 %v2134, %v2120
      %v2136 = vadd.f32 %v2135, %v2121
      %v2137 = vadd.f32 %v2136, %v2122
      %v2138 = vadd.f32 %v2137, %v2123
      %v2139 = vadd.f32 %v2138, %v2124
      %v2140 = vadd.f32 %v2139, %v2125
      %v2141 = vadd.f32 %v2140, %v2126
      %v2142 = vadd.f32 %v2141, %v2127
      %v2143 = vadd.f32 %v2142, %v2128
      %v2144 = vadd.f32 %v2143, %v2129
      %v2145 = vadd.f32 %v2144, %v2130
      %v2146 = vrot.slane %v2145, 4
      %v2147 = vadd.f32 %v2145, %v2146
      %v2148 = vrot.slane %v2147, 2
      %v2149 = vadd.f32 %v2147, %v2148
      %v2150 = vrot.slane %v2149, 1
      %v2151 = vadd.f32 %v2149, %v2150
      %vm2152 = vcmask 1040384
      %v2153 = vsel %vm2152, %v2114, %v2151
      %2154 = vst [vmem:[%s304] sm:$0x3] %v2153
      %s2155 = smul.u32 %s20, 2
      %s2156 = sadd.s32 %s2155, %s21
      %s2157 = smul.u32 16, %s2156
      %p2158 = scmp.lt.s32.totalorder %s2157, 63
      %s2159 = scalar_select %p2158, %s2157, 63
      %s2160 = smul.addr %s2159, 8
      %s2161 = scalar_lea.vmem %s3, %s2160
      %s2162 = smul.u32 %s20, 2
      %s2163 = sadd.s32 %s2162, %s21
      %p2164 = scmp.lt.s32.totalorder %s2163, 3
      %s2165 = scalar_select %p2164, %s2163, 3
      %s2166 = smul.addr %s2165, 2
      %s2167 = scalar_lea.vmem %s4, %s2166
      // Predicated region
      $region33: #{double_conv.4} parent=31 // pred_check
        %p2168 = pneg %p129
      $region34: #{double_conv.4} parent=31 // pred_check_branch
        %2170 = sbr.rel (%p2168) target = $region36
      $region35: #{double_conv.4} parent=31 // pred_region
        %s2171 = smul.u32 %s20, 2
        %s2172 = sadd.s32 %s2171, %s21
        %s2173 = smul.u32 16, %s2172
      $region36: #{double_conv.4} parent=31 // pred_fallthru
        _
      // Predicated region
      $region37: #{double_conv.4} parent=31 // pred_check
        %p2174 = pneg %p159
      $region38: #{double_conv.4} parent=31 // pred_check_branch
        %2176 = sbr.rel (%p2174) target = $region40
      $region39: #{double_conv.4} parent=31 // pred_region
        %s2177 = smul.u32 %s20, 2
        %s2178 = sadd.s32 %s2177, %s21
      $region40: #{double_conv.4} parent=31 // pred_fallthru
        _
    $region32: #{double_conv.4} parent=5 // pred_fallthru
      _
    %p2179 = scmp.le.s32.totalorder 2, %s11
    // Predicated region
    $region41: #{double_conv.4} parent=5 // pred_check
      %p2180 = pneg %p2179
    $region42: #{double_conv.4} parent=5 // pred_check_branch
      %2182 = sbr.rel (%p2180) target = $region44
    $region43: #{double_conv.4} parent=5 // pred_region
      %s2183 = ssub.s32 %s11, 2
      // Predicated region
      $region45: #{double_conv.4} parent=43 // pred_check
        %p2184 = pneg %p135
      $region46: #{double_conv.4} parent=43 // pred_check_branch
        %2186 = sbr.rel (%p2184) target = $region48
      $region47: #{double_conv.4} parent=43 // pred_region
        %s2187 = smul.u32 %s22, 2
        %s2188 = sadd.s32 %s2187, %s23
        %s2189 = smul.u32 16, %s2188
        %p2190 = scmp.lt.s32.totalorder %s2189, 63
        %s2191 = scalar_select %p2190, %s2189, 63
        %s2192 = smul.addr %s2191, 8
        %s2193 = scalar_lea.vmem %s3, %s2192
      $region48: #{double_conv.4} parent=43 // pred_fallthru
        _
      // Predicated region
      $region49: #{double_conv.4} parent=43 // pred_check
        %p2194 = pneg %p165
      $region50: #{double_conv.4} parent=43 // pred_check_branch
        %2196 = sbr.rel (%p2194) target = $region52
      $region51: #{double_conv.4} parent=43 // pred_region
        %s2197 = smul.u32 %s22, 2
        %s2198 = sadd.s32 %s2197, %s23
        %p2199 = scmp.lt.s32.totalorder %s2198, 3
        %s2200 = scalar_select %p2199, %s2198, 3
        %s2201 = smul.addr %s2200, 2
        %s2202 = scalar_lea.vmem %s4, %s2201
      $region52: #{double_conv.4} parent=43 // pred_fallthru
        _
    $region44: #{double_conv.4} parent=5 // pred_fallthru
      _
  $region6: #{double_conv.4} parent=0 // loop_footer
    %s15 = sadd.s32 1, %s11
  $region7: #{double_conv.4} parent=0 // loop_footer_branch
    %10 = sbr.rel target = $region3
  $region8: #{double_conv.4} parent=0 // loop_exit
    _

</llo_original>
